<compile_context>
chip_gen: v6e
topology: v6e:2x2x1
jax: 0.10.0
libtpu: 0.0.40
codegen_flags: <defaults>
</compile_context>

<pallas_src>
import functools

import jax
import jax.numpy as jnp
from jax.experimental import pallas as pl
from jax.experimental.pallas import tpu as pltpu


def _round_up(v, m):
    return (v + m - 1) // m * m


def _vmem_budget_bytes():
    """Generation-aware VMEM ceiling (~85% of physical, headroom for compiler
    scratch / semaphores); conservative 64 MiB fallback if unqueryable."""
    try:
        cap = pltpu.get_tpu_info().vmem_capacity_bytes
    except Exception:
        cap = 64 * 1024 * 1024
    return int(0.85 * cap)


def _sage_layer_kernel(a_ref, x_ref, inv_ref, w_ref, b_ref, o_ref, acc_ref, *,
                       apply_relu):
    """One SAGEConv layer, K-tiled aggregation with a VMEM-resident X.

    a_ref  : (tm, tk)          int8  adjacency edge-count tile (rows=dst, cols=src)
    x_ref  : (Np, Fin_p)       bf16  full feature matrix (resident, constant block)
    inv_ref: (tm, 1)           f32   1 / in_degree for this dst tile
    w_ref  : (2*Fin_p, Fout_p) bf16  fused [Wl; Wr]
    b_ref  : (1, Fout_p)       f32   bias
    o_ref  : (tm, Fout_p)      out   output tile (bf16 for layer 1, f32 for layer 2)
    acc_ref: (tm, 2*Fin_p)     f32   scratch: [:, :Fin_p]=neighbor-sum accumulator,
                                              [:, Fin_p:]=self features
    """
    tm, tk = a_ref.shape
    f_in_p = x_ref.shape[1]
    i = pl.program_id(0)
    k = pl.program_id(1)

    @pl.when(k == 0)
    def _init():
        # Zero only the aggregation half; stage the self features now so the
        # copy hides under the pipelined k-loop instead of the epilogue.
        acc_ref[:, 0:f_in_p] = jnp.zeros((tm, f_in_p), jnp.float32)
        row = pl.multiple_of(i * tm, tm)
        acc_ref[:, f_in_p:2 * f_in_p] = (
            x_ref[pl.ds(row, tm), :].astype(jnp.float32))

    # Accumulate neighbor-feature sums: 1-byte count adjacency (exact values,
    # cast to bf16 on-chip) x bf16 features on the MXU, f32 accumulation.
    col = pl.multiple_of(k * tk, tk)
    acc_ref[:, 0:f_in_p] += jnp.dot(
        a_ref[...].astype(jnp.bfloat16),
        x_ref[pl.ds(col, tk), :],
        preferred_element_type=jnp.float32)

    @pl.when(k == pl.num_programs(1) - 1)
    def _finish():
        # Exact mean: scale the accumulated neighbor sum by 1/in_degree (f32).
        acc_ref[:, 0:f_in_p] = acc_ref[:, 0:f_in_p] * inv_ref[...]
        # One fused weight matmul with K = 2*Fin_p on the bf16 MXU path.
        out = jnp.dot(acc_ref[...].astype(jnp.bfloat16), w_ref[...],
                      preferred_element_type=jnp.float32) + b_ref[...]
        if apply_relu:
            out = jnp.maximum(out, 0.0)
        o_ref[...] = out.astype(o_ref.dtype)


def sage_conv(adj_i8, x_bf16, inv_deg, w_bf16, bias_f32, *, apply_relu, tm, tk,
              out_dtype):
    """adj_i8: (Np, Np) int8 counts; x_bf16: (Np, Fin_p) bf16;
    inv_deg: (Np, 1) f32; w_bf16: (2*Fin_p, Fout_p) bf16; bias_f32: (1, Fout_p)."""
    n_p, f_in_p = x_bf16.shape
    f_out_p = w_bf16.shape[1]
    assert n_p % tm == 0 and n_p % tk == 0

    kernel = functools.partial(_sage_layer_kernel, apply_relu=apply_relu)

    out_bytes = jnp.dtype(out_dtype).itemsize
    vmem_bytes = (
        2 * tm * tk * 1                    # A tile (int8), double-buffered
        + 2 * n_p * f_in_p * 2             # resident X (bf16, constant block)
        + 2 * tm * 128 * 4                 # inverse-degree column (lane-padded)
        + 2 * 2 * f_in_p * f_out_p * 2     # fused W (bf16)
        + 2 * 8 * f_out_p * 4              # bias (sublane-padded)
        + 2 * tm * f_out_p * out_bytes     # output tile
        + tm * 2 * f_in_p * 4              # accumulator scratch
    )
    vmem_limit = int(min(max(int(1.5 * vmem_bytes), 32 * 1024 * 1024),
                         _vmem_budget_bytes()))

    return pl.pallas_call(
        kernel,
        out_shape=jax.ShapeDtypeStruct((n_p, f_out_p), out_dtype),
        grid_spec=pltpu.PrefetchScalarGridSpec(
            num_scalar_prefetch=0,
            grid=(n_p // tm, n_p // tk),
            in_specs=[
                pl.BlockSpec((tm, tk), lambda i, k: (i, k)),            # A tile
                pl.BlockSpec((n_p, f_in_p), lambda i, k: (0, 0)),       # X (resident)
                pl.BlockSpec((tm, 1), lambda i, k: (i, 0)),             # 1/deg
                pl.BlockSpec((2 * f_in_p, f_out_p), lambda i, k: (0, 0)),  # W fused
                pl.BlockSpec((1, f_out_p), lambda i, k: (0, 0)),        # bias
            ],
            out_specs=pl.BlockSpec((tm, f_out_p), lambda i, k: (i, 0)),
            scratch_shapes=[pltpu.VMEM((tm, 2 * f_in_p), jnp.float32)],
        ),
        compiler_params=pltpu.CompilerParams(
            dimension_semantics=("parallel", "arbitrary"),
            vmem_limit_bytes=vmem_limit),
    )(adj_i8, x_bf16, inv_deg, w_bf16, bias_f32)


def build_adjacency(edge_index, num_nodes_padded):
    """edge_index: (2, E) int32, row 0 = src, row 1 = dst (PyG convention).
    Returns (A_counts int8, inv_in_degree f32) with A[dst, src] = #edges(src->dst);
    padded rows/cols (ids >= true N) are all-zero.  Mean aggregation is then
    (A @ X) * inv_deg, exactly matching scatter-mean (duplicates counted)."""
    src, dst = edge_index[0], edge_index[1]
    ones = jnp.ones(src.shape, jnp.int32)
    a = jnp.zeros((num_nodes_padded, num_nodes_padded),
                  jnp.int32).at[dst, src].add(ones)
    deg = a.sum(axis=1, keepdims=True).astype(jnp.float32)
    inv_deg = 1.0 / jnp.maximum(deg, 1.0)
    # NOTE: int8 is exact for per-pair edge multiplicity < 128.
    return a.astype(jnp.int8), inv_deg


def _pad2(w, rows, cols):
    return jnp.zeros((rows, cols), w.dtype).at[:w.shape[0], :w.shape[1]].set(w)


def graphsage_forward(x, edge_index, params, *, tile=512):
    """GraphSAGE.forward: conv1 -> relu -> dropout(eval, identity) -> conv2."""
    n, f_in = x.shape
    hidden = params["w1_l"].shape[1]
    f_out = params["w2_l"].shape[1]

    # Lane-dense padding of all feature dims.
    f_in_p = _round_up(f_in, 128)
    hid_p = _round_up(hidden, 128)
    f_out_p = _round_up(f_out, 128)

    # Node padding / tile choice: pad to 128, then take the largest tile that
    # divides n_p while keeping >= 2 node tiles (so the "parallel" axis can be
    # split across TensorCores on v7x).  X is VMEM-resident, so larger tiles
    # mainly amortize the per-grid-step overhead.
    n_p = _round_up(n, 128)
    tm = 128
    for cand in (256, 512, 1024):
        if cand <= tile and n_p % cand == 0 and n_p // cand >= 2:
            tm = cand
    tk = tm

    adj_i8, inv_deg = build_adjacency(edge_index, n_p)      # (Np, Np) i8, (Np,1) f32
    x_p = jnp.zeros((n_p, f_in_p), jnp.bfloat16).at[:n, :f_in].set(
        x.astype(jnp.bfloat16))

    # Fused weights: W = [Wl; Wr] (bf16) so the kernel does one K=2*Fin_p matmul.
    w1 = jnp.concatenate([_pad2(params["w1_l"], f_in_p, hid_p),
                          _pad2(params["w1_r"], f_in_p, hid_p)],
                         axis=0).astype(jnp.bfloat16)
    b1 = _pad2(params["b1"].reshape(1, -1), 1, hid_p)
    w2 = jnp.concatenate([_pad2(params["w2_l"], hid_p, f_out_p),
                          _pad2(params["w2_r"], hid_p, f_out_p)],
                         axis=0).astype(jnp.bfloat16)
    b2 = _pad2(params["b2"].reshape(1, -1), 1, f_out_p)

    # Layer 1 output kept bf16 (halves the layer1->layer2 HBM round trip; it is
    # directly the bf16 X operand of layer 2).
    h = sage_conv(adj_i8, x_p, inv_deg, w1, b1, apply_relu=True,
                  tm=tm, tk=tk, out_dtype=jnp.bfloat16)
    # F.dropout(p=0.5, training=False) -> identity in eval mode.
    out_p = sage_conv(adj_i8, h, inv_deg, w2, b2, apply_relu=False,
                      tm=tm, tk=tk, out_dtype=jnp.float32)
    return out_p[:n, :f_out]


def init_params(key, in_channels, hidden_channels, out_channels):
    k = jax.random.split(key, 6)
    s1 = 1.0 / jnp.sqrt(in_channels)
    s2 = 1.0 / jnp.sqrt(hidden_channels)
    return {
        "w1_l": jax.random.uniform(k[0], (in_channels, hidden_channels),
                                   jnp.float32, -s1, s1),
        "w1_r": jax.random.uniform(k[1], (in_channels, hidden_channels),
                                   jnp.float32, -s1, s1),
        "b1": jax.random.uniform(k[2], (hidden_channels,), jnp.float32, -s1, s1),
        "w2_l": jax.random.uniform(k[3], (hidden_channels, out_channels),
                                   jnp.float32, -s2, s2),
        "w2_r": jax.random.uniform(k[4], (hidden_channels, out_channels),
                                   jnp.float32, -s2, s2),
        "b2": jax.random.uniform(k[5], (out_channels,), jnp.float32, -s2, s2),
    }


if __name__ == "__main__":
    key = jax.random.PRNGKey(0)
    num_nodes, num_edges = 128, 512
    in_channels, hidden_channels, out_channels = 32, 64, 16

    k_x, k_e, k_p = jax.random.split(key, 3)
    x = jax.random.normal(k_x, (num_nodes, in_channels), jnp.float32)
    edge_index = jax.random.randint(k_e, (2, num_edges), 0, num_nodes,
                                    dtype=jnp.int32)
    params = init_params(k_p, in_channels, hidden_channels, out_channels)

    out = jax.jit(graphsage_forward)(x, edge_index, params)
    jax.block_until_ready(out)
    assert out.shape == (num_nodes, out_channels)

    # Unpadded adjacency counts / inverse degree for the references.
    src, dst = edge_index[0], edge_index[1]
    a_cnt = jnp.zeros((num_nodes, num_nodes), jnp.float32).at[dst, src].add(1.0)
    deg = a_cnt.sum(axis=1, keepdims=True)
    inv_d = 1.0 / jnp.maximum(deg, 1.0)

    # Reference 1: mimics the kernel's quantization points (bf16 X / h / W,
    # exact count adjacency + f32 1/deg scale, f32 accumulation).
    def ref_layer(x_in, wl, wr, b, relu):
        xq = x_in.astype(jnp.bfloat16).astype(jnp.float32)
        agg = (a_cnt @ xq) * inv_d
        cat = jnp.concatenate([agg, xq], axis=1)
        w = jnp.concatenate([wl, wr], axis=0).astype(jnp.bfloat16)
        o = cat.astype(jnp.bfloat16).astype(jnp.float32) @ w.astype(jnp.float32) + b
        return jnp.maximum(o, 0.0) if relu else o

    h_q = ref_layer(x, params["w1_l"], params["w1_r"], params["b1"], True)
    ref_q = ref_layer(h_q, params["w2_l"], params["w2_r"], params["b2"], False)
    assert jnp.allclose(out, ref_q, atol=1e-2, rtol=1e-2)

    # Reference 2: pure-f32 semantics of the original module (loose tolerance,
    # only bf16 quantization error expected).
    a_mean = a_cnt * inv_d
    h32 = jnp.maximum(a_mean @ x @ params["w1_l"] + x @ params["w1_r"]
                      + params["b1"], 0.0)
    ref32 = a_mean @ h32 @ params["w2_l"] + h32 @ params["w2_r"] + params["b2"]
    assert jnp.allclose(out, ref32, atol=5e-2, rtol=5e-2)

    print("KERNEL_OK")
</pallas_src>

<mosaic_0001>
module attributes {stable_mosaic.version = 11 : i64} {
  func.func private @main(%arg0: i32) attributes {dimension_semantics = [#tpu.dimension_semantics<core_parallel>], iteration_bounds = array<i64: 2>, tpu.core_type = #tpu.core_type<sc_scalar_subcore>, window_params = []} {
    return
  }
}

module attributes {stable_mosaic.version = 11 : i64} {
  func.func private @main(%arg0: i32) attributes {dimension_semantics = [#tpu.dimension_semantics<core_parallel>], iteration_bounds = array<i64: 2>, tpu.core_type = #tpu.core_type<sc_scalar_subcore>, window_params = []} {
    return
  }
}

module attributes {stable_mosaic.version = 11 : i64} {
  func.func @_sage_layer_kernel(%arg0: i32, %arg1: i32, %arg2: memref<128x128xi8, #tpu.memory_space<vmem>>, %arg3: memref<128x128xbf16, #tpu.memory_space<vmem>>, %arg4: memref<128x1xf32, #tpu.memory_space<vmem>>, %arg5: memref<256x128xbf16, #tpu.memory_space<vmem>>, %arg6: memref<1x128xf32, #tpu.memory_space<vmem>>, %arg7: memref<128x128xbf16, #tpu.memory_space<vmem>>, %arg8: memref<128x256xf32, #tpu.memory_space<vmem>>) attributes {dimension_semantics = [#tpu.dimension_semantics<parallel>, #tpu.dimension_semantics<arbitrary>], iteration_bounds = array<i64: 1, 1>, scalar_prefetch = 0 : i64, scratch_operands = 1 : i64, tpu.core_type = #tpu.core_type<tc>, window_params = [{transform_indices = @transform_0, window_bounds = array<i64: 128, 128>}, {pipeline_mode = #tpu.pipeline_mode<synchronous>, transform_indices = @transform_1, window_bounds = array<i64: 128, 128>}, {transform_indices = @transform_2, window_bounds = array<i64: 128, 1>}, {pipeline_mode = #tpu.pipeline_mode<synchronous>, transform_indices = @transform_3, window_bounds = array<i64: 256, 128>}, {pipeline_mode = #tpu.pipeline_mode<synchronous>, transform_indices = @transform_4, window_bounds = array<i64: 1, 128>}, {transform_indices = @transform_5, window_bounds = array<i64: 128, 128>}]} {
    %c0_i32 = arith.constant 0 : i32
    %0 = arith.cmpi eq, %arg1, %c0_i32 : i32
    %1 = arith.extui %0 : i1 to i32
    %c0_i32_0 = arith.constant 0 : i32
    %2 = arith.cmpi ne, %1, %c0_i32_0 : i32
    scf.if %2 {
      %cst_9 = arith.constant 0.000000e+00 : f32
      %16 = vector.broadcast %cst_9 : f32 to vector<128x128xf32>
      %c0_10 = arith.constant 0 : index
      %c0_11 = arith.constant 0 : index
      %17 = vector.load %arg8[%c0_10, %c0_11] : memref<128x256xf32, #tpu.memory_space<vmem>>, vector<128x128xf32>
      tpu.vector_store %arg8[%c0_10, %c0_11], %16 {strides = array<i32>} : memref<128x256xf32, #tpu.memory_space<vmem>>, vector<128x128xf32>,
      %c128_i32_12 = arith.constant 128 : i32
      %18 = arith.muli %arg0, %c128_i32_12 : i32
      %19 = tpu.assume_multiple %18, 128 : i32
      %20 = arith.index_cast %19 : i32 to index
      %c0_13 = arith.constant 0 : index
      %21 = vector.load %arg3[%20, %c0_13] : memref<128x128xbf16, #tpu.memory_space<vmem>>, vector<128x128xbf16>
      %22 = arith.extf %21 : vector<128x128xbf16> to vector<128x128xf32>
      %c0_14 = arith.constant 0 : index
      %c128 = arith.constant 128 : index
      %23 = vector.load %arg8[%c0_14, %c128] : memref<128x256xf32, #tpu.memory_space<vmem>>, vector<128x128xf32>
      tpu.vector_store %arg8[%c0_14, %c128], %22 {strides = array<i32>} : memref<128x256xf32, #tpu.memory_space<vmem>>, vector<128x128xf32>,
    } else {
    }
    %c128_i32 = arith.constant 128 : i32
    %3 = arith.muli %arg1, %c128_i32 : i32
    %4 = tpu.assume_multiple %3, 128 : i32
    %c0 = arith.constant 0 : index
    %c0_1 = arith.constant 0 : index
    %5 = vector.load %arg8[%c0, %c0_1] : memref<128x256xf32, #tpu.memory_space<vmem>>, vector<128x128xf32>
    %c0_2 = arith.constant 0 : index
    %c0_3 = arith.constant 0 : index
    %6 = vector.load %arg2[%c0_2, %c0_3] : memref<128x128xi8, #tpu.memory_space<vmem>>, vector<128x128xi8>
    %7 = arith.sitofp %6 : vector<128x128xi8> to vector<128x128xbf16>
    %8 = arith.index_cast %4 : i32 to index
    %c0_4 = arith.constant 0 : index
    %9 = vector.load %arg3[%8, %c0_4] : memref<128x128xbf16, #tpu.memory_space<vmem>>, vector<128x128xbf16>
    %cst = arith.constant dense<0.000000e+00> : vector<128x128xf32>
    %10 = tpu.matmul %7, %9, %cst {dimension_numbers = #tpu.dot_dimension_numbers<[1], [0], [0], [1], [0, 0, 1, 1], [], []>} : vector<128x128xbf16>, vector<128x128xbf16>, vector<128x128xf32> -> vector<128x128xf32>
    %11 = arith.addf %5, %10 : vector<128x128xf32>
    %c0_5 = arith.constant 0 : index
    %c0_6 = arith.constant 0 : index
    %12 = vector.load %arg8[%c0_5, %c0_6] : memref<128x256xf32, #tpu.memory_space<vmem>>, vector<128x128xf32>
    tpu.vector_store %arg8[%c0_5, %c0_6], %11 {strides = array<i32>} : memref<128x256xf32, #tpu.memory_space<vmem>>, vector<128x128xf32>,
    %c0_i32_7 = arith.constant 0 : i32
    %13 = arith.cmpi eq, %arg1, %c0_i32_7 : i32
    %14 = arith.extui %13 : i1 to i32
    %c0_i32_8 = arith.constant 0 : i32
    %15 = arith.cmpi ne, %14, %c0_i32_8 : i32
    scf.if %15 {
      %c0_9 = arith.constant 0 : index
      %c0_10 = arith.constant 0 : index
      %16 = vector.load %arg8[%c0_9, %c0_10] : memref<128x256xf32, #tpu.memory_space<vmem>>, vector<128x128xf32>
      %c0_11 = arith.constant 0 : index
      %c0_12 = arith.constant 0 : index
      %17 = vector.load %arg4[%c0_11, %c0_12] : memref<128x1xf32, #tpu.memory_space<vmem>>, vector<128x1xf32>
      %18 = vector.broadcast %17 : vector<128x1xf32> to vector<128x128xf32>
      %19 = arith.mulf %16, %18 : vector<128x128xf32>
      %c0_13 = arith.constant 0 : index
      %c0_14 = arith.constant 0 : index
      %20 = vector.load %arg8[%c0_13, %c0_14] : memref<128x256xf32, #tpu.memory_space<vmem>>, vector<128x128xf32>
      tpu.vector_store %arg8[%c0_13, %c0_14], %19 {strides = array<i32>} : memref<128x256xf32, #tpu.memory_space<vmem>>, vector<128x128xf32>,
      %c0_15 = arith.constant 0 : index
      %c0_16 = arith.constant 0 : index
      %21 = vector.load %arg8[%c0_15, %c0_16] : memref<128x256xf32, #tpu.memory_space<vmem>>, vector<128x256xf32>
      %22 = arith.truncf %21 : vector<128x256xf32> to vector<128x256xbf16>
      %c0_17 = arith.constant 0 : index
      %c0_18 = arith.constant 0 : index
      %23 = vector.load %arg5[%c0_17, %c0_18] : memref<256x128xbf16, #tpu.memory_space<vmem>>, vector<256x128xbf16>
      %cst_19 = arith.constant dense<0.000000e+00> : vector<128x128xf32>
      %24 = tpu.matmul %22, %23, %cst_19 {dimension_numbers = #tpu.dot_dimension_numbers<[1], [0], [0], [1], [0, 0, 1, 1], [], []>} : vector<128x256xbf16>, vector<256x128xbf16>, vector<128x128xf32> -> vector<128x128xf32>
      %c0_20 = arith.constant 0 : index
      %c0_21 = arith.constant 0 : index
      %25 = vector.load %arg6[%c0_20, %c0_21] : memref<1x128xf32, #tpu.memory_space<vmem>>, vector<1x128xf32>
      %26 = vector.broadcast %25 : vector<1x128xf32> to vector<128x128xf32>
      %27 = arith.addf %24, %26 : vector<128x128xf32>
      %cst_22 = arith.constant 0.000000e+00 : f32
      %28 = vector.broadcast %cst_22 : f32 to vector<128x128xf32>
      %29 = arith.maximumf %27, %28 : vector<128x128xf32>
      %30 = arith.truncf %29 : vector<128x128xf32> to vector<128x128xbf16>
      %c0_23 = arith.constant 0 : index
      %c0_24 = arith.constant 0 : index
      %31 = vector.load %arg7[%c0_23, %c0_24] : memref<128x128xbf16, #tpu.memory_space<vmem>>, vector<128x128xbf16>
      tpu.vector_store %arg7[%c0_23, %c0_24], %30 {strides = array<i32>} : memref<128x128xbf16, #tpu.memory_space<vmem>>, vector<128x128xbf16>,
    } else {
    }
    return
  }
  func.func @transform_0(%arg0: i32, %arg1: i32) -> (i32, i32) {
    %c0_i32 = arith.constant 0 : i32
    return %arg0, %arg1 : i32, i32
  }
  func.func @transform_1(%arg0: i32, %arg1: i32) -> (i32, i32) {
    %c0_i32 = arith.constant 0 : i32
    %c0_i32_0 = arith.constant 0 : i32
    %c0_i32_1 = arith.constant 0 : i32
    return %c0_i32, %c0_i32_0 : i32, i32
  }
  func.func @transform_2(%arg0: i32, %arg1: i32) -> (i32, i32) {
    %c0_i32 = arith.constant 0 : i32
    %c0_i32_0 = arith.constant 0 : i32
    return %arg0, %c0_i32 : i32, i32
  }
  func.func @transform_3(%arg0: i32, %arg1: i32) -> (i32, i32) {
    %c0_i32 = arith.constant 0 : i32
    %c0_i32_0 = arith.constant 0 : i32
    %c0_i32_1 = arith.constant 0 : i32
    return %c0_i32, %c0_i32_0 : i32, i32
  }
  func.func @transform_4(%arg0: i32, %arg1: i32) -> (i32, i32) {
    %c0_i32 = arith.constant 0 : i32
    %c0_i32_0 = arith.constant 0 : i32
    %c0_i32_1 = arith.constant 0 : i32
    return %c0_i32, %c0_i32_0 : i32, i32
  }
  func.func @transform_5(%arg0: i32, %arg1: i32) -> (i32, i32) {
    %c0_i32 = arith.constant 0 : i32
    %c0_i32_0 = arith.constant 0 : i32
    return %arg0, %c0_i32 : i32, i32
  }
}

module attributes {stable_mosaic.version = 11 : i64} {
  func.func @_sage_layer_kernel(%arg0: i32, %arg1: i32, %arg2: memref<128x128xi8, #tpu.memory_space<vmem>>, %arg3: memref<128x128xbf16, #tpu.memory_space<vmem>>, %arg4: memref<128x1xf32, #tpu.memory_space<vmem>>, %arg5: memref<256x128xbf16, #tpu.memory_space<vmem>>, %arg6: memref<1x128xf32, #tpu.memory_space<vmem>>, %arg7: memref<128x128xf32, #tpu.memory_space<vmem>>, %arg8: memref<128x256xf32, #tpu.memory_space<vmem>>) attributes {dimension_semantics = [#tpu.dimension_semantics<parallel>, #tpu.dimension_semantics<arbitrary>], iteration_bounds = array<i64: 1, 1>, scalar_prefetch = 0 : i64, scratch_operands = 1 : i64, tpu.core_type = #tpu.core_type<tc>, window_params = [{transform_indices = @transform_0, window_bounds = array<i64: 128, 128>}, {pipeline_mode = #tpu.pipeline_mode<synchronous>, transform_indices = @transform_1, window_bounds = array<i64: 128, 128>}, {transform_indices = @transform_2, window_bounds = array<i64: 128, 1>}, {pipeline_mode = #tpu.pipeline_mode<synchronous>, transform_indices = @transform_3, window_bounds = array<i64: 256, 128>}, {pipeline_mode = #tpu.pipeline_mode<synchronous>, transform_indices = @transform_4, window_bounds = array<i64: 1, 128>}, {transform_indices = @transform_5, window_bounds = array<i64: 128, 128>}]} {
    %c0_i32 = arith.constant 0 : i32
    %0 = arith.cmpi eq, %arg1, %c0_i32 : i32
    %1 = arith.extui %0 : i1 to i32
    %c0_i32_0 = arith.constant 0 : i32
    %2 = arith.cmpi ne, %1, %c0_i32_0 : i32
    scf.if %2 {
      %cst_9 = arith.constant 0.000000e+00 : f32
      %16 = vector.broadcast %cst_9 : f32 to vector<128x128xf32>
      %c0_10 = arith.constant 0 : index
      %c0_11 = arith.constant 0 : index
      %17 = vector.load %arg8[%c0_10, %c0_11] : memref<128x256xf32, #tpu.memory_space<vmem>>, vector<128x128xf32>
      tpu.vector_store %arg8[%c0_10, %c0_11], %16 {strides = array<i32>} : memref<128x256xf32, #tpu.memory_space<vmem>>, vector<128x128xf32>,
      %c128_i32_12 = arith.constant 128 : i32
      %18 = arith.muli %arg0, %c128_i32_12 : i32
      %19 = tpu.assume_multiple %18, 128 : i32
      %20 = arith.index_cast %19 : i32 to index
      %c0_13 = arith.constant 0 : index
      %21 = vector.load %arg3[%20, %c0_13] : memref<128x128xbf16, #tpu.memory_space<vmem>>, vector<128x128xbf16>
      %22 = arith.extf %21 : vector<128x128xbf16> to vector<128x128xf32>
      %c0_14 = arith.constant 0 : index
      %c128 = arith.constant 128 : index
      %23 = vector.load %arg8[%c0_14, %c128] : memref<128x256xf32, #tpu.memory_space<vmem>>, vector<128x128xf32>
      tpu.vector_store %arg8[%c0_14, %c128], %22 {strides = array<i32>} : memref<128x256xf32, #tpu.memory_space<vmem>>, vector<128x128xf32>,
    } else {
    }
    %c128_i32 = arith.constant 128 : i32
    %3 = arith.muli %arg1, %c128_i32 : i32
    %4 = tpu.assume_multiple %3, 128 : i32
    %c0 = arith.constant 0 : index
    %c0_1 = arith.constant 0 : index
    %5 = vector.load %arg8[%c0, %c0_1] : memref<128x256xf32, #tpu.memory_space<vmem>>, vector<128x128xf32>
    %c0_2 = arith.constant 0 : index
    %c0_3 = arith.constant 0 : index
    %6 = vector.load %arg2[%c0_2, %c0_3] : memref<128x128xi8, #tpu.memory_space<vmem>>, vector<128x128xi8>
    %7 = arith.sitofp %6 : vector<128x128xi8> to vector<128x128xbf16>
    %8 = arith.index_cast %4 : i32 to index
    %c0_4 = arith.constant 0 : index
    %9 = vector.load %arg3[%8, %c0_4] : memref<128x128xbf16, #tpu.memory_space<vmem>>, vector<128x128xbf16>
    %cst = arith.constant dense<0.000000e+00> : vector<128x128xf32>
    %10 = tpu.matmul %7, %9, %cst {dimension_numbers = #tpu.dot_dimension_numbers<[1], [0], [0], [1], [0, 0, 1, 1], [], []>} : vector<128x128xbf16>, vector<128x128xbf16>, vector<128x128xf32> -> vector<128x128xf32>
    %11 = arith.addf %5, %10 : vector<128x128xf32>
    %c0_5 = arith.constant 0 : index
    %c0_6 = arith.constant 0 : index
    %12 = vector.load %arg8[%c0_5, %c0_6] : memref<128x256xf32, #tpu.memory_space<vmem>>, vector<128x128xf32>
    tpu.vector_store %arg8[%c0_5, %c0_6], %11 {strides = array<i32>} : memref<128x256xf32, #tpu.memory_space<vmem>>, vector<128x128xf32>,
    %c0_i32_7 = arith.constant 0 : i32
    %13 = arith.cmpi eq, %arg1, %c0_i32_7 : i32
    %14 = arith.extui %13 : i1 to i32
    %c0_i32_8 = arith.constant 0 : i32
    %15 = arith.cmpi ne, %14, %c0_i32_8 : i32
    scf.if %15 {
      %c0_9 = arith.constant 0 : index
      %c0_10 = arith.constant 0 : index
      %16 = vector.load %arg8[%c0_9, %c0_10] : memref<128x256xf32, #tpu.memory_space<vmem>>, vector<128x128xf32>
      %c0_11 = arith.constant 0 : index
      %c0_12 = arith.constant 0 : index
      %17 = vector.load %arg4[%c0_11, %c0_12] : memref<128x1xf32, #tpu.memory_space<vmem>>, vector<128x1xf32>
      %18 = vector.broadcast %17 : vector<128x1xf32> to vector<128x128xf32>
      %19 = arith.mulf %16, %18 : vector<128x128xf32>
      %c0_13 = arith.constant 0 : index
      %c0_14 = arith.constant 0 : index
      %20 = vector.load %arg8[%c0_13, %c0_14] : memref<128x256xf32, #tpu.memory_space<vmem>>, vector<128x128xf32>
      tpu.vector_store %arg8[%c0_13, %c0_14], %19 {strides = array<i32>} : memref<128x256xf32, #tpu.memory_space<vmem>>, vector<128x128xf32>,
      %c0_15 = arith.constant 0 : index
      %c0_16 = arith.constant 0 : index
      %21 = vector.load %arg8[%c0_15, %c0_16] : memref<128x256xf32, #tpu.memory_space<vmem>>, vector<128x256xf32>
      %22 = arith.truncf %21 : vector<128x256xf32> to vector<128x256xbf16>
      %c0_17 = arith.constant 0 : index
      %c0_18 = arith.constant 0 : index
      %23 = vector.load %arg5[%c0_17, %c0_18] : memref<256x128xbf16, #tpu.memory_space<vmem>>, vector<256x128xbf16>
      %cst_19 = arith.constant dense<0.000000e+00> : vector<128x128xf32>
      %24 = tpu.matmul %22, %23, %cst_19 {dimension_numbers = #tpu.dot_dimension_numbers<[1], [0], [0], [1], [0, 0, 1, 1], [], []>} : vector<128x256xbf16>, vector<256x128xbf16>, vector<128x128xf32> -> vector<128x128xf32>
      %c0_20 = arith.constant 0 : index
      %c0_21 = arith.constant 0 : index
      %25 = vector.load %arg6[%c0_20, %c0_21] : memref<1x128xf32, #tpu.memory_space<vmem>>, vector<1x128xf32>
      %26 = vector.broadcast %25 : vector<1x128xf32> to vector<128x128xf32>
      %27 = arith.addf %24, %26 : vector<128x128xf32>
      %c0_22 = arith.constant 0 : index
      %c0_23 = arith.constant 0 : index
      %28 = vector.load %arg7[%c0_22, %c0_23] : memref<128x128xf32, #tpu.memory_space<vmem>>, vector<128x128xf32>
      tpu.vector_store %arg7[%c0_22, %c0_23], %27 {strides = array<i32>} : memref<128x128xf32, #tpu.memory_space<vmem>>, vector<128x128xf32>,
    } else {
    }
    return
  }
  func.func @transform_0(%arg0: i32, %arg1: i32) -> (i32, i32) {
    %c0_i32 = arith.constant 0 : i32
    return %arg0, %arg1 : i32, i32
  }
  func.func @transform_1(%arg0: i32, %arg1: i32) -> (i32, i32) {
    %c0_i32 = arith.constant 0 : i32
    %c0_i32_0 = arith.constant 0 : i32
    %c0_i32_1 = arith.constant 0 : i32
    return %c0_i32, %c0_i32_0 : i32, i32
  }
  func.func @transform_2(%arg0: i32, %arg1: i32) -> (i32, i32) {
    %c0_i32 = arith.constant 0 : i32
    %c0_i32_0 = arith.constant 0 : i32
    return %arg0, %c0_i32 : i32, i32
  }
  func.func @transform_3(%arg0: i32, %arg1: i32) -> (i32, i32) {
    %c0_i32 = arith.constant 0 : i32
    %c0_i32_0 = arith.constant 0 : i32
    %c0_i32_1 = arith.constant 0 : i32
    return %c0_i32, %c0_i32_0 : i32, i32
  }
  func.func @transform_4(%arg0: i32, %arg1: i32) -> (i32, i32) {
    %c0_i32 = arith.constant 0 : i32
    %c0_i32_0 = arith.constant 0 : i32
    %c0_i32_1 = arith.constant 0 : i32
    return %c0_i32, %c0_i32_0 : i32, i32
  }
  func.func @transform_5(%arg0: i32, %arg1: i32) -> (i32, i32) {
    %c0_i32 = arith.constant 0 : i32
    %c0_i32_0 = arith.constant 0 : i32
    return %arg0, %c0_i32 : i32, i32
  }
}

</mosaic_0001>

<llo_original>
// kernel: graphsage_forward.3
$region0: #{graphsage_forward.3}
  #allocation0 [shape = 'u32[]', space=smem, size = 0x4, offset = 0x4, fixed_abs, tag = 'smem constant byte address 0x4 - core index']
  #allocation1 [shape = 'u32[144,128]{1,0:T(1,128)}', space=vmem, size = 0x12000, scoped, tag = 'internal scratch']
  #allocation2 [shape = 'f32[128,256]{1,0:T(8,128)}', space=vmem, size = 0x20000, scoped, tag = 'scratch operand']
  %s0 = inlined_call_operand.vmem [shape: s8[128,128], index: 0, kind: input, shape index: {}]
  %s1 = inlined_call_operand.vmem [shape: bf16[128,128], index: 1, kind: input, shape index: {}]
  %s2 = inlined_call_operand.vmem [shape: f32[128,1], index: 2, kind: input, shape index: {}]
  %s3 = inlined_call_operand.vmem [shape: bf16[256,128], index: 3, kind: input, shape index: {}]
  %s4 = inlined_call_operand.vmem [shape: f32[1,128], index: 4, kind: input, shape index: {}]
  %s5 = inlined_call_operand.vmem [shape: f32[128,128], index: 5, kind: output, shape index: {}]
  %s6 = sld [smem:[#allocation0]]
  $region38: #{graphsage_forward.3} parent=0
    _
  %s8 = ssub.s32 1, %s6
  %s9 = scalar_select 0, %s8, %s6
  // Predicated region
  $region2: #{graphsage_forward.3} parent=0 // pred_check
    _
  $region3: #{graphsage_forward.3} parent=0 // pred_check_branch
    %11 = sbr.rel (0) target = $region5
  $region4: #{graphsage_forward.3} parent=0 // pred_region
    _
  $region5: #{graphsage_forward.3} parent=0 // pred_fallthru
    _
  // Predicated region
  $region6: #{graphsage_forward.3} parent=0 // pred_check
    _
  $region7: #{graphsage_forward.3} parent=0 // pred_check_branch
    %13 = sbr.rel (0) target = $region9
  $region8: #{graphsage_forward.3} parent=0 // pred_region
    _
  $region9: #{graphsage_forward.3} parent=0 // pred_fallthru
    _
  // Predicated region
  $region10: #{graphsage_forward.3} parent=0 // pred_check
    _
  $region11: #{graphsage_forward.3} parent=0 // pred_check_branch
    %15 = sbr.rel (0) target = $region13
  $region12: #{graphsage_forward.3} parent=0 // pred_region
    _
  $region13: #{graphsage_forward.3} parent=0 // pred_fallthru
    _
  // Predicated region
  $region14: #{graphsage_forward.3} parent=0 // pred_check
    _
  $region15: #{graphsage_forward.3} parent=0 // pred_check_branch
    %17 = sbr.rel (0) target = $region17
  $region16: #{graphsage_forward.3} parent=0 // pred_region
    _
  $region17: #{graphsage_forward.3} parent=0 // pred_fallthru
    _
  // Predicated region
  $region18: #{graphsage_forward.3} parent=0 // pred_check
    _
  $region19: #{graphsage_forward.3} parent=0 // pred_check_branch
    %19 = sbr.rel (0) target = $region21
  $region20: #{graphsage_forward.3} parent=0 // pred_region
    _
  $region21: #{graphsage_forward.3} parent=0 // pred_fallthru
    _
  %p21 = scmp.eq.s32.totalorder 0, 0
  // Predicated region
  $region22: #{graphsage_forward.3} parent=0 // pred_check
    %p22 = pneg %p21
  $region23: #{graphsage_forward.3} parent=0 // pred_check_branch
    %24 = sbr.rel (%p22) target = $region25
  $region24: #{graphsage_forward.3} parent=0 // pred_region
    %25 = vst [vmem:[#allocation2] sm:$0xff] 0.0
    %26 = vst [vmem:[#allocation2 + $0x10] sm:$0xff] 0.0
    %27 = vst [vmem:[#allocation2 + $0x20] sm:$0xff] 0.0
    %28 = vst [vmem:[#allocation2 + $0x30] sm:$0xff] 0.0
    %29 = vst [vmem:[#allocation2 + $0x40] sm:$0xff] 0.0
    %30 = vst [vmem:[#allocation2 + $0x50] sm:$0xff] 0.0
    %31 = vst [vmem:[#allocation2 + $0x60] sm:$0xff] 0.0
    %32 = vst [vmem:[#allocation2 + $0x70] sm:$0xff] 0.0
    %33 = vst [vmem:[#allocation2 + $0x80] sm:$0xff] 0.0
    %34 = vst [vmem:[#allocation2 + $0x90] sm:$0xff] 0.0
    %35 = vst [vmem:[#allocation2 + $0xa0] sm:$0xff] 0.0
    %36 = vst [vmem:[#allocation2 + $0xb0] sm:$0xff] 0.0
    %37 = vst [vmem:[#allocation2 + $0xc0] sm:$0xff] 0.0
    %38 = vst [vmem:[#allocation2 + $0xd0] sm:$0xff] 0.0
    %39 = vst [vmem:[#allocation2 + $0xe0] sm:$0xff] 0.0
    %40 = vst [vmem:[#allocation2 + $0xf0] sm:$0xff] 0.0
    %s41 = smul.u32 0, 128
    %s42 = sshra.s32 %s41, 3
    %s43 = sand.u32 %s41, 7
    %s44 = smul.addr %s42, 4
    %s45 = scalar_lea.vmem %s1, %s44
    %v46 = vld [vmem:[%s45] sm:$0xf]
    %v47 = vld [vmem:[%s45 + $0x4] sm:$0xf]
    %v48 = vld [vmem:[%s45 + $0x8] sm:$0xf]
    %v49 = vld [vmem:[%s45 + $0xc] sm:$0xf]
    %v50 = vld [vmem:[%s45 + $0x10] sm:$0xf]
    %v51 = vld [vmem:[%s45 + $0x14] sm:$0xf]
    %v52 = vld [vmem:[%s45 + $0x18] sm:$0xf]
    %v53 = vld [vmem:[%s45 + $0x1c] sm:$0xf]
    %v54 = vld [vmem:[%s45 + $0x20] sm:$0xf]
    %v55 = vld [vmem:[%s45 + $0x24] sm:$0xf]
    %v56 = vld [vmem:[%s45 + $0x28] sm:$0xf]
    %v57 = vld [vmem:[%s45 + $0x2c] sm:$0xf]
    %v58 = vld [vmem:[%s45 + $0x30] sm:$0xf]
    %v59 = vld [vmem:[%s45 + $0x34] sm:$0xf]
    %v60 = vld [vmem:[%s45 + $0x38] sm:$0xf]
    %v61 = vld [vmem:[%s45 + $0x3c] sm:$0xf]
    %v62 = vunpack.c.l.bf16 %v46
    %v63 = vunpack.c.l.bf16 %v47
    %v64 = vunpack.c.l.bf16 %v48
    %v65 = vunpack.c.l.bf16 %v49
    %v66 = vunpack.c.l.bf16 %v50
    %v67 = vunpack.c.l.bf16 %v51
    %v68 = vunpack.c.l.bf16 %v52
    %v69 = vunpack.c.l.bf16 %v53
    %v70 = vunpack.c.l.bf16 %v54
    %v71 = vunpack.c.l.bf16 %v55
    %v72 = vunpack.c.l.bf16 %v56
    %v73 = vunpack.c.l.bf16 %v57
    %v74 = vunpack.c.l.bf16 %v58
    %v75 = vunpack.c.l.bf16 %v59
    %v76 = vunpack.c.l.bf16 %v60
    %v77 = vunpack.c.l.bf16 %v61
    %78 = vst [vmem:[#allocation2 + $0x8] sm:$0xff] %v62
    %79 = vst [vmem:[#allocation2 + $0x18] sm:$0xff] %v63
    %80 = vst [vmem:[#allocation2 + $0x28] sm:$0xff] %v64
    %81 = vst [vmem:[#allocation2 + $0x38] sm:$0xff] %v65
    %82 = vst [vmem:[#allocation2 + $0x48] sm:$0xff] %v66
    %83 = vst [vmem:[#allocation2 + $0x58] sm:$0xff] %v67
    %84 = vst [vmem:[#allocation2 + $0x68] sm:$0xff] %v68
    %85 = vst [vmem:[#allocation2 + $0x78] sm:$0xff] %v69
    %86 = vst [vmem:[#allocation2 + $0x88] sm:$0xff] %v70
    %87 = vst [vmem:[#allocation2 + $0x98] sm:$0xff] %v71
    %88 = vst [vmem:[#allocation2 + $0xa8] sm:$0xff] %v72
    %89 = vst [vmem:[#allocation2 + $0xb8] sm:$0xff] %v73
    %90 = vst [vmem:[#allocation2 + $0xc8] sm:$0xff] %v74
    %91 = vst [vmem:[#allocation2 + $0xd8] sm:$0xff] %v75
    %92 = vst [vmem:[#allocation2 + $0xe8] sm:$0xff] %v76
    %93 = vst [vmem:[#allocation2 + $0xf8] sm:$0xff] %v77
  $region25: #{graphsage_forward.3} parent=0 // pred_fallthru
    _
  %s94 = smul.u32 0, 128
  %v95 = vld [vmem:[#allocation2] sm:$0xff]
  %v96 = vld [vmem:[#allocation2 + $0x10] sm:$0xff]
  %v97 = vld [vmem:[#allocation2 + $0x20] sm:$0xff]
  %v98 = vld [vmem:[#allocation2 + $0x30] sm:$0xff]
  %v99 = vld [vmem:[#allocation2 + $0x40] sm:$0xff]
  %v100 = vld [vmem:[#allocation2 + $0x50] sm:$0xff]
  %v101 = vld [vmem:[#allocation2 + $0x60] sm:$0xff]
  %v102 = vld [vmem:[#allocation2 + $0x70] sm:$0xff]
  %v103 = vld [vmem:[#allocation2 + $0x80] sm:$0xff]
  %v104 = vld [vmem:[#allocation2 + $0x90] sm:$0xff]
  %v105 = vld [vmem:[#allocation2 + $0xa0] sm:$0xff]
  %v106 = vld [vmem:[#allocation2 + $0xb0] sm:$0xff]
  %v107 = vld [vmem:[#allocation2 + $0xc0] sm:$0xff]
  %v108 = vld [vmem:[#allocation2 + $0xd0] sm:$0xff]
  %v109 = vld [vmem:[#allocation2 + $0xe0] sm:$0xff]
  %v110 = vld [vmem:[#allocation2 + $0xf0] sm:$0xff]
  %v111 = vld [vmem:[%s0] sm:$0xff]
  %v112 = vld [vmem:[%s0 + $0x8] sm:$0xff]
  %v113 = vld [vmem:[%s0 + $0x10] sm:$0xff]
  %v114 = vld [vmem:[%s0 + $0x18] sm:$0xff]
  %v115 = vunpack.c.l.s8.bf16 %v111
  %v116 = vunpack.c.h.s8.bf16 %v111
  %v117 = vunpack.c.l.s8.bf16 %v112
  %v118 = vunpack.c.h.s8.bf16 %v112
  %v119 = vunpack.c.l.s8.bf16 %v113
  %v120 = vunpack.c.h.s8.bf16 %v113
  %v121 = vunpack.c.l.s8.bf16 %v114
  %v122 = vunpack.c.h.s8.bf16 %v114
  %s123 = sshra.s32 %s94, 3
  %s124 = sand.u32 %s94, 7
  %s125 = smul.addr %s123, 4
  %s126 = scalar_lea.vmem %s1, %s125
  %v127 = vld [vmem:[%s126] sm:$0xf]
  %v128 = vld [vmem:[%s126 + $0x4] sm:$0xf]
  %v129 = vld [vmem:[%s126 + $0x8] sm:$0xf]
  %v130 = vld [vmem:[%s126 + $0xc] sm:$0xf]
  %v131 = vld [vmem:[%s126 + $0x10] sm:$0xf]
  %v132 = vld [vmem:[%s126 + $0x14] sm:$0xf]
  %v133 = vld [vmem:[%s126 + $0x18] sm:$0xf]
  %v134 = vld [vmem:[%s126 + $0x1c] sm:$0xf]
  %v135 = vld [vmem:[%s126 + $0x20] sm:$0xf]
  %v136 = vld [vmem:[%s126 + $0x24] sm:$0xf]
  %v137 = vld [vmem:[%s126 + $0x28] sm:$0xf]
  %v138 = vld [vmem:[%s126 + $0x2c] sm:$0xf]
  %v139 = vld [vmem:[%s126 + $0x30] sm:$0xf]
  %v140 = vld [vmem:[%s126 + $0x34] sm:$0xf]
  %v141 = vld [vmem:[%s126 + $0x38] sm:$0xf]
  %v142 = vld [vmem:[%s126 + $0x3c] sm:$0xf]
  %v159 = vunpack.c.l.b16 %v127
  %v160 = vunpack.c.l.b16 %v128
  %v161 = vunpack.c.l.b16 %v129
  %v162 = vunpack.c.l.b16 %v130
  %v163 = vunpack.c.l.b16 %v131
  %v164 = vunpack.c.l.b16 %v132
  %v165 = vunpack.c.l.b16 %v133
  %v166 = vunpack.c.l.b16 %v134
  %v167 = vunpack.c.l.b16 %v135
  %v168 = vunpack.c.l.b16 %v136
  %v169 = vunpack.c.l.b16 %v137
  %v170 = vunpack.c.l.b16 %v138
  %v171 = vunpack.c.l.b16 %v139
  %v172 = vunpack.c.l.b16 %v140
  %v173 = vunpack.c.l.b16 %v141
  %v174 = vunpack.c.l.b16 %v142
  %v175 = vpack.c.b16 %v160, %v159
  %v176 = vpack.c.b16 %v162, %v161
  %v177 = vpack.c.b16 %v164, %v163
  %v178 = vpack.c.b16 %v166, %v165
  %v179 = vpack.c.b16 %v168, %v167
  %v180 = vpack.c.b16 %v170, %v169
  %v181 = vpack.c.b16 %v172, %v171
  %v182 = vpack.c.b16 %v174, %v173
  %191 = vmatprep.subr.bf16.mxu0 0
  %192 = vmatpush1.bf16.msra.mxu0 %v182
  %193 = vmatprep.subr.bf16.mxu0 0
  %194 = vmatpush1.bf16.msra.mxu0 %v181
  %195 = vmatprep.subr.bf16.mxu0 0
  %196 = vmatpush1.bf16.msra.mxu0 %v180
  %197 = vmatprep.subr.bf16.mxu0 0
  %198 = vmatpush1.bf16.msra.mxu0 %v179
  %199 = vmatprep.subr.bf16.mxu0 0
  %200 = vmatpush1.bf16.msra.mxu0 %v178
  %201 = vmatprep.subr.bf16.mxu0 0
  %202 = vmatpush1.bf16.msra.mxu0 %v177
  %203 = vmatprep.subr.bf16.mxu0 0
  %204 = vmatpush1.bf16.msra.mxu0 %v176
  %205 = vmatprep.subr.bf16.mxu0 0
  %206 = vmatpush1.bf16.msra.mxu0 %v175
  %207 = vmatprep.subr.bf16.mxu0 0
  %208 = vmatpush2.bf16.msra.mxu0 0
  %209 = vmatprep.subr.bf16.mxu0 0
  %210 = vmatpush2.bf16.msra.mxu0 0
  %211 = vmatprep.subr.bf16.mxu0 0
  %212 = vmatpush2.bf16.msra.mxu0 0
  %213 = vmatprep.subr.bf16.mxu0 0
  %214 = vmatpush2.bf16.msra.mxu0 0
  %215 = vmatprep.subr.bf16.mxu0 0
  %216 = vmatpush2.bf16.msra.mxu0 0
  %217 = vmatprep.subr.bf16.mxu0 0
  %218 = vmatpush2.bf16.msra.mxu0 0
  %219 = vmatprep.subr.bf16.mxu0 0
  %220 = vmatpush2.bf16.msra.mxu0 0
  %221 = vmatprep.subr.bf16.mxu0 0
  %222 = vmatpush2.bf16.msra.mxu0 0
  %223 = vmatprep.mubr.bf16.mxu0 0
  %224 = vmatmul.mubr.bf16.gmra.mxu0 %v115
  %v225 = vpop.f32.mrf.mxu0
  %v226 = vadd.f32 0.0, %v225
  %v227 = vpop.f32.mrf.mxu0
  %v228 = vpop.f32.mrf.mxu0
  %v229 = vadd.f32 0.0, %v228
  %v230 = vpop.f32.mrf.mxu0
  %231 = vmatprep.mubr.bf16.mxu0 0
  %232 = vmatmul.mubr.bf16.gmra.mxu0 %v116
  %v233 = vpop.f32.mrf.mxu0
  %v234 = vadd.f32 0.0, %v233
  %v235 = vpop.f32.mrf.mxu0
  %v236 = vpop.f32.mrf.mxu0
  %v237 = vadd.f32 0.0, %v236
  %v238 = vpop.f32.mrf.mxu0
  %239 = vmatprep.mubr.bf16.mxu0 0
  %240 = vmatmul.mubr.bf16.gmra.mxu0 %v117
  %v241 = vpop.f32.mrf.mxu0
  %v242 = vadd.f32 0.0, %v241
  %v243 = vpop.f32.mrf.mxu0
  %v244 = vpop.f32.mrf.mxu0
  %v245 = vadd.f32 0.0, %v244
  %v246 = vpop.f32.mrf.mxu0
  %247 = vmatprep.mubr.bf16.mxu0 0
  %248 = vmatmul.mubr.bf16.gmra.mxu0 %v118
  %v249 = vpop.f32.mrf.mxu0
  %v250 = vadd.f32 0.0, %v249
  %v251 = vpop.f32.mrf.mxu0
  %v252 = vpop.f32.mrf.mxu0
  %v253 = vadd.f32 0.0, %v252
  %v254 = vpop.f32.mrf.mxu0
  %255 = vmatprep.mubr.bf16.mxu0 0
  %256 = vmatmul.mubr.bf16.gmra.mxu0 %v119
  %v257 = vpop.f32.mrf.mxu0
  %v258 = vadd.f32 0.0, %v257
  %v259 = vpop.f32.mrf.mxu0
  %v260 = vpop.f32.mrf.mxu0
  %v261 = vadd.f32 0.0, %v260
  %v262 = vpop.f32.mrf.mxu0
  %263 = vmatprep.mubr.bf16.mxu0 0
  %264 = vmatmul.mubr.bf16.gmra.mxu0 %v120
  %v265 = vpop.f32.mrf.mxu0
  %v266 = vadd.f32 0.0, %v265
  %v267 = vpop.f32.mrf.mxu0
  %v268 = vpop.f32.mrf.mxu0
  %v269 = vadd.f32 0.0, %v268
  %v270 = vpop.f32.mrf.mxu0
  %271 = vmatprep.mubr.bf16.mxu0 0
  %272 = vmatmul.mubr.bf16.gmra.mxu0 %v121
  %v273 = vpop.f32.mrf.mxu0
  %v274 = vadd.f32 0.0, %v273
  %v275 = vpop.f32.mrf.mxu0
  %v276 = vpop.f32.mrf.mxu0
  %v277 = vadd.f32 0.0, %v276
  %v278 = vpop.f32.mrf.mxu0
  %279 = vmatprep.mubr.bf16.mxu0 0
  %280 = vmatmul.mubr.bf16.gmra.mxu0 %v122
  %v281 = vpop.f32.mrf.mxu0
  %v282 = vadd.f32 0.0, %v281
  %v283 = vpop.f32.mrf.mxu0
  %v284 = vpop.f32.mrf.mxu0
  %v285 = vadd.f32 0.0, %v284
  %v286 = vpop.f32.mrf.mxu0
  %287 = vdwg.mxu0
  %v288 = vadd.f32 %v95, %v226
  %v289 = vadd.f32 %v96, %v229
  %v290 = vadd.f32 %v97, %v234
  %v291 = vadd.f32 %v98, %v237
  %v292 = vadd.f32 %v99, %v242
  %v293 = vadd.f32 %v100, %v245
  %v294 = vadd.f32 %v101, %v250
  %v295 = vadd.f32 %v102, %v253
  %v296 = vadd.f32 %v103, %v258
  %v297 = vadd.f32 %v104, %v261
  %v298 = vadd.f32 %v105, %v266
  %v299 = vadd.f32 %v106, %v269
  %v300 = vadd.f32 %v107, %v274
  %v301 = vadd.f32 %v108, %v277
  %v302 = vadd.f32 %v109, %v282
  %v303 = vadd.f32 %v110, %v285
  %304 = vst [vmem:[#allocation2] sm:$0xff] %v288
  %305 = vst [vmem:[#allocation2 + $0x10] sm:$0xff] %v289
  %306 = vst [vmem:[#allocation2 + $0x20] sm:$0xff] %v290
  %307 = vst [vmem:[#allocation2 + $0x30] sm:$0xff] %v291
  %308 = vst [vmem:[#allocation2 + $0x40] sm:$0xff] %v292
  %309 = vst [vmem:[#allocation2 + $0x50] sm:$0xff] %v293
  %310 = vst [vmem:[#allocation2 + $0x60] sm:$0xff] %v294
  %311 = vst [vmem:[#allocation2 + $0x70] sm:$0xff] %v295
  %312 = vst [vmem:[#allocation2 + $0x80] sm:$0xff] %v296
  %313 = vst [vmem:[#allocation2 + $0x90] sm:$0xff] %v297
  %314 = vst [vmem:[#allocation2 + $0xa0] sm:$0xff] %v298
  %315 = vst [vmem:[#allocation2 + $0xb0] sm:$0xff] %v299
  %316 = vst [vmem:[#allocation2 + $0xc0] sm:$0xff] %v300
  %317 = vst [vmem:[#allocation2 + $0xd0] sm:$0xff] %v301
  %318 = vst [vmem:[#allocation2 + $0xe0] sm:$0xff] %v302
  %319 = vst [vmem:[#allocation2 + $0xf0] sm:$0xff] %v303
  // Predicated region
  $region26: #{graphsage_forward.3} parent=0 // pred_check
    %p320 = pneg %p21
  $region27: #{graphsage_forward.3} parent=0 // pred_check_branch
    %322 = sbr.rel (%p320) target = $region29
  $region28: #{graphsage_forward.3} parent=0 // pred_region
    %v323 = vld [vmem:[#allocation2] sm:$0xff]
    %v324 = vld [vmem:[#allocation2 + $0x10] sm:$0xff]
    %v325 = vld [vmem:[#allocation2 + $0x20] sm:$0xff]
    %v326 = vld [vmem:[#allocation2 + $0x30] sm:$0xff]
    %v327 = vld [vmem:[#allocation2 + $0x40] sm:$0xff]
    %v328 = vld [vmem:[#allocation2 + $0x50] sm:$0xff]
    %v329 = vld [vmem:[#allocation2 + $0x60] sm:$0xff]
    %v330 = vld [vmem:[#allocation2 + $0x70] sm:$0xff]
    %v331 = vld [vmem:[#allocation2 + $0x80] sm:$0xff]
    %v332 = vld [vmem:[#allocation2 + $0x90] sm:$0xff]
    %v333 = vld [vmem:[#allocation2 + $0xa0] sm:$0xff]
    %v334 = vld [vmem:[#allocation2 + $0xb0] sm:$0xff]
    %v335 = vld [vmem:[#allocation2 + $0xc0] sm:$0xff]
    %v336 = vld [vmem:[#allocation2 + $0xd0] sm:$0xff]
    %v337 = vld [vmem:[#allocation2 + $0xe0] sm:$0xff]
    %v338 = vld [vmem:[#allocation2 + $0xf0] sm:$0xff]
    %v339 = vld [vmem:[%s2] sm:$0xff]
    %v340 = vld [vmem:[%s2 + $0x8] sm:$0xff]
    %v341 = vld [vmem:[%s2 + $0x10] sm:$0xff]
    %v342 = vld [vmem:[%s2 + $0x18] sm:$0xff]
    %v343 = vld [vmem:[%s2 + $0x20] sm:$0xff]
    %v344 = vld [vmem:[%s2 + $0x28] sm:$0xff]
    %v345 = vld [vmem:[%s2 + $0x30] sm:$0xff]
    %v346 = vld [vmem:[%s2 + $0x38] sm:$0xff]
    %v347 = vld [vmem:[%s2 + $0x40] sm:$0xff]
    %v348 = vld [vmem:[%s2 + $0x48] sm:$0xff]
    %v349 = vld [vmem:[%s2 + $0x50] sm:$0xff]
    %v350 = vld [vmem:[%s2 + $0x58] sm:$0xff]
    %v351 = vld [vmem:[%s2 + $0x60] sm:$0xff]
    %v352 = vld [vmem:[%s2 + $0x68] sm:$0xff]
    %v353 = vld [vmem:[%s2 + $0x70] sm:$0xff]
    %v354 = vld [vmem:[%s2 + $0x78] sm:$0xff]
    %356 = vset.pattern.permute.xlu0 0
    %357 = vperm.xlu0 %356, %v339
    %v358 = vpop.permute.xlu0 %357
    %361 = vset.pattern.permute.xlu0 0
    %362 = vperm.xlu0 %361, %v340
    %v363 = vpop.permute.xlu0 %362
    %366 = vset.pattern.permute.xlu0 0
    %367 = vperm.xlu0 %366, %v341
    %v368 = vpop.permute.xlu0 %367
    %371 = vset.pattern.permute.xlu0 0
    %372 = vperm.xlu0 %371, %v342
    %v373 = vpop.permute.xlu0 %372
    %376 = vset.pattern.permute.xlu0 0
    %377 = vperm.xlu0 %376, %v343
    %v378 = vpop.permute.xlu0 %377
    %381 = vset.pattern.permute.xlu0 0
    %382 = vperm.xlu0 %381, %v344
    %v383 = vpop.permute.xlu0 %382
    %386 = vset.pattern.permute.xlu0 0
    %387 = vperm.xlu0 %386, %v345
    %v388 = vpop.permute.xlu0 %387
    %391 = vset.pattern.permute.xlu0 0
    %392 = vperm.xlu0 %391, %v346
    %v393 = vpop.permute.xlu0 %392
    %396 = vset.pattern.permute.xlu0 0
    %397 = vperm.xlu0 %396, %v347
    %v398 = vpop.permute.xlu0 %397
    %401 = vset.pattern.permute.xlu0 0
    %402 = vperm.xlu0 %401, %v348
    %v403 = vpop.permute.xlu0 %402
    %406 = vset.pattern.permute.xlu0 0
    %407 = vperm.xlu0 %406, %v349
    %v408 = vpop.permute.xlu0 %407
    %411 = vset.pattern.permute.xlu0 0
    %412 = vperm.xlu0 %411, %v350
    %v413 = vpop.permute.xlu0 %412
    %416 = vset.pattern.permute.xlu0 0
    %417 = vperm.xlu0 %416, %v351
    %v418 = vpop.permute.xlu0 %417
    %421 = vset.pattern.permute.xlu0 0
    %422 = vperm.xlu0 %421, %v352
    %v423 = vpop.permute.xlu0 %422
    %426 = vset.pattern.permute.xlu0 0
    %427 = vperm.xlu0 %426, %v353
    %v428 = vpop.permute.xlu0 %427
    %431 = vset.pattern.permute.xlu0 0
    %432 = vperm.xlu0 %431, %v354
    %v433 = vpop.permute.xlu0 %432
    %v435 = vmul.f32 %v323, %v358
    %v436 = vmul.f32 %v324, %v363
    %v437 = vmul.f32 %v325, %v368
    %v438 = vmul.f32 %v326, %v373
    %v439 = vmul.f32 %v327, %v378
    %v440 = vmul.f32 %v328, %v383
    %v441 = vmul.f32 %v329, %v388
    %v442 = vmul.f32 %v330, %v393
    %v443 = vmul.f32 %v331, %v398
    %v444 = vmul.f32 %v332, %v403
    %v445 = vmul.f32 %v333, %v408
    %v446 = vmul.f32 %v334, %v413
    %v447 = vmul.f32 %v335, %v418
    %v448 = vmul.f32 %v336, %v423
    %v449 = vmul.f32 %v337, %v428
    %v450 = vmul.f32 %v338, %v433
    %451 = vst [vmem:[#allocation2] sm:$0xff] %v435
    %452 = vst [vmem:[#allocation2 + $0x10] sm:$0xff] %v436
    %453 = vst [vmem:[#allocation2 + $0x20] sm:$0xff] %v437
    %454 = vst [vmem:[#allocation2 + $0x30] sm:$0xff] %v438
    %455 = vst [vmem:[#allocation2 + $0x40] sm:$0xff] %v439
    %456 = vst [vmem:[#allocation2 + $0x50] sm:$0xff] %v440
    %457 = vst [vmem:[#allocation2 + $0x60] sm:$0xff] %v441
    %458 = vst [vmem:[#allocation2 + $0x70] sm:$0xff] %v442
    %459 = vst [vmem:[#allocation2 + $0x80] sm:$0xff] %v443
    %460 = vst [vmem:[#allocation2 + $0x90] sm:$0xff] %v444
    %461 = vst [vmem:[#allocation2 + $0xa0] sm:$0xff] %v445
    %462 = vst [vmem:[#allocation2 + $0xb0] sm:$0xff] %v446
    %463 = vst [vmem:[#allocation2 + $0xc0] sm:$0xff] %v447
    %464 = vst [vmem:[#allocation2 + $0xd0] sm:$0xff] %v448
    %465 = vst [vmem:[#allocation2 + $0xe0] sm:$0xff] %v449
    %466 = vst [vmem:[#allocation2 + $0xf0] sm:$0xff] %v450
    %v467 = vld [vmem:[#allocation2] sm:$0xff]
    %v468 = vld [vmem:[#allocation2 + $0x8] sm:$0xff]
    %v469 = vld [vmem:[#allocation2 + $0x10] sm:$0xff]
    %v470 = vld [vmem:[#allocation2 + $0x18] sm:$0xff]
    %v471 = vld [vmem:[#allocation2 + $0x20] sm:$0xff]
    %v472 = vld [vmem:[#allocation2 + $0x28] sm:$0xff]
    %v473 = vld [vmem:[#allocation2 + $0x30] sm:$0xff]
    %v474 = vld [vmem:[#allocation2 + $0x38] sm:$0xff]
    %v475 = vld [vmem:[#allocation2 + $0x40] sm:$0xff]
    %v476 = vld [vmem:[#allocation2 + $0x48] sm:$0xff]
    %v477 = vld [vmem:[#allocation2 + $0x50] sm:$0xff]
    %v478 = vld [vmem:[#allocation2 + $0x58] sm:$0xff]
    %v479 = vld [vmem:[#allocation2 + $0x60] sm:$0xff]
    %v480 = vld [vmem:[#allocation2 + $0x68] sm:$0xff]
    %v481 = vld [vmem:[#allocation2 + $0x70] sm:$0xff]
    %v482 = vld [vmem:[#allocation2 + $0x78] sm:$0xff]
    %v483 = vld [vmem:[#allocation2 + $0x80] sm:$0xff]
    %v484 = vld [vmem:[#allocation2 + $0x88] sm:$0xff]
    %v485 = vld [vmem:[#allocation2 + $0x90] sm:$0xff]
    %v486 = vld [vmem:[#allocation2 + $0x98] sm:$0xff]
    %v487 = vld [vmem:[#allocation2 + $0xa0] sm:$0xff]
    %v488 = vld [vmem:[#allocation2 + $0xa8] sm:$0xff]
    %v489 = vld [vmem:[#allocation2 + $0xb0] sm:$0xff]
    %v490 = vld [vmem:[#allocation2 + $0xb8] sm:$0xff]
    %v491 = vld [vmem:[#allocation2 + $0xc0] sm:$0xff]
    %v492 = vld [vmem:[#allocation2 + $0xc8] sm:$0xff]
    %v493 = vld [vmem:[#allocation2 + $0xd0] sm:$0xff]
    %v494 = vld [vmem:[#allocation2 + $0xd8] sm:$0xff]
    %v495 = vld [vmem:[#allocation2 + $0xe0] sm:$0xff]
    %v496 = vld [vmem:[#allocation2 + $0xe8] sm:$0xff]
    %v497 = vld [vmem:[#allocation2 + $0xf0] sm:$0xff]
    %v498 = vld [vmem:[#allocation2 + $0xf8] sm:$0xff]
    %v499 = vpack.c.bf16 %v469, %v467
    %v500 = vpack.c.bf16 %v470, %v468
    %v501 = vpack.c.bf16 %v473, %v471
    %v502 = vpack.c.bf16 %v474, %v472
    %v503 = vpack.c.bf16 %v477, %v475
    %v504 = vpack.c.bf16 %v478, %v476
    %v505 = vpack.c.bf16 %v481, %v479
    %v506 = vpack.c.bf16 %v482, %v480
    %v507 = vpack.c.bf16 %v485, %v483
    %v508 = vpack.c.bf16 %v486, %v484
    %v509 = vpack.c.bf16 %v489, %v487
    %v510 = vpack.c.bf16 %v490, %v488
    %v511 = vpack.c.bf16 %v493, %v491
    %v512 = vpack.c.bf16 %v494, %v492
    %v513 = vpack.c.bf16 %v497, %v495
    %v514 = vpack.c.bf16 %v498, %v496
    %v515 = vld [vmem:[%s3] sm:$0xf]
    %v516 = vld [vmem:[%s3 + $0x4] sm:$0xf]
    %v517 = vld [vmem:[%s3 + $0x8] sm:$0xf]
    %v518 = vld [vmem:[%s3 + $0xc] sm:$0xf]
    %v519 = vld [vmem:[%s3 + $0x10] sm:$0xf]
    %v520 = vld [vmem:[%s3 + $0x14] sm:$0xf]
    %v521 = vld [vmem:[%s3 + $0x18] sm:$0xf]
    %v522 = vld [vmem:[%s3 + $0x1c] sm:$0xf]
    %v523 = vld [vmem:[%s3 + $0x20] sm:$0xf]
    %v524 = vld [vmem:[%s3 + $0x24] sm:$0xf]
    %v525 = vld [vmem:[%s3 + $0x28] sm:$0xf]
    %v526 = vld [vmem:[%s3 + $0x2c] sm:$0xf]
    %v527 = vld [vmem:[%s3 + $0x30] sm:$0xf]
    %v528 = vld [vmem:[%s3 + $0x34] sm:$0xf]
    %v529 = vld [vmem:[%s3 + $0x38] sm:$0xf]
    %v530 = vld [vmem:[%s3 + $0x3c] sm:$0xf]
    %v531 = vld [vmem:[%s3 + $0x40] sm:$0xf]
    %v532 = vld [vmem:[%s3 + $0x44] sm:$0xf]
    %v533 = vld [vmem:[%s3 + $0x48] sm:$0xf]
    %v534 = vld [vmem:[%s3 + $0x4c] sm:$0xf]
    %v535 = vld [vmem:[%s3 + $0x50] sm:$0xf]
    %v536 = vld [vmem:[%s3 + $0x54] sm:$0xf]
    %v537 = vld [vmem:[%s3 + $0x58] sm:$0xf]
    %v538 = vld [vmem:[%s3 + $0x5c] sm:$0xf]
    %v539 = vld [vmem:[%s3 + $0x60] sm:$0xf]
    %v540 = vld [vmem:[%s3 + $0x64] sm:$0xf]
    %v541 = vld [vmem:[%s3 + $0x68] sm:$0xf]
    %v542 = vld [vmem:[%s3 + $0x6c] sm:$0xf]
    %v543 = vld [vmem:[%s3 + $0x70] sm:$0xf]
    %v544 = vld [vmem:[%s3 + $0x74] sm:$0xf]
    %v545 = vld [vmem:[%s3 + $0x78] sm:$0xf]
    %v546 = vld [vmem:[%s3 + $0x7c] sm:$0xf]
    %v547 = vld [vmem:[%s4] sm:$0x1]
    %v549 = vlaneseq
    %v550 = vshrl.u32 %v549, 7
    %v551 = vsub.s32 0, %v550
    %v552 = vrot.slane %v547, %v551
    %v586 = vunpack.c.l.b16 %v515
    %v587 = vunpack.c.l.b16 %v516
    %v588 = vunpack.c.l.b16 %v517
    %v589 = vunpack.c.l.b16 %v518
    %v590 = vunpack.c.l.b16 %v519
    %v591 = vunpack.c.l.b16 %v520
    %v592 = vunpack.c.l.b16 %v521
    %v593 = vunpack.c.l.b16 %v522
    %v594 = vunpack.c.l.b16 %v523
    %v595 = vunpack.c.l.b16 %v524
    %v596 = vunpack.c.l.b16 %v525
    %v597 = vunpack.c.l.b16 %v526
    %v598 = vunpack.c.l.b16 %v527
    %v599 = vunpack.c.l.b16 %v528
    %v600 = vunpack.c.l.b16 %v529
    %v601 = vunpack.c.l.b16 %v530
    %v602 = vunpack.c.l.b16 %v531
    %v603 = vunpack.c.l.b16 %v532
    %v604 = vunpack.c.l.b16 %v533
    %v605 = vunpack.c.l.b16 %v534
    %v606 = vunpack.c.l.b16 %v535
    %v607 = vunpack.c.l.b16 %v536
    %v608 = vunpack.c.l.b16 %v537
    %v609 = vunpack.c.l.b16 %v538
    %v610 = vunpack.c.l.b16 %v539
    %v611 = vunpack.c.l.b16 %v540
    %v612 = vunpack.c.l.b16 %v541
    %v613 = vunpack.c.l.b16 %v542
    %v614 = vunpack.c.l.b16 %v543
    %v615 = vunpack.c.l.b16 %v544
    %v616 = vunpack.c.l.b16 %v545
    %v617 = vunpack.c.l.b16 %v546
    %v618 = vpack.c.b16 %v587, %v586
    %v619 = vpack.c.b16 %v589, %v588
    %v620 = vpack.c.b16 %v591, %v590
    %v621 = vpack.c.b16 %v593, %v592
    %v622 = vpack.c.b16 %v595, %v594
    %v623 = vpack.c.b16 %v597, %v596
    %v624 = vpack.c.b16 %v599, %v598
    %v625 = vpack.c.b16 %v601, %v600
    %v626 = vpack.c.b16 %v603, %v602
    %v627 = vpack.c.b16 %v605, %v604
    %v628 = vpack.c.b16 %v607, %v606
    %v629 = vpack.c.b16 %v609, %v608
    %v630 = vpack.c.b16 %v611, %v610
    %v631 = vpack.c.b16 %v613, %v612
    %v632 = vpack.c.b16 %v615, %v614
    %v633 = vpack.c.b16 %v617, %v616
    %650 = vmatprep.subr.bf16.mxu0 0
    %651 = vmatpush1.bf16.msra.mxu0 %v625
    %652 = vmatprep.subr.bf16.mxu0 0
    %653 = vmatpush1.bf16.msra.mxu0 %v624
    %654 = vmatprep.subr.bf16.mxu0 0
    %655 = vmatpush1.bf16.msra.mxu0 %v623
    %656 = vmatprep.subr.bf16.mxu0 0
    %657 = vmatpush1.bf16.msra.mxu0 %v622
    %658 = vmatprep.subr.bf16.mxu0 0
    %659 = vmatpush1.bf16.msra.mxu0 %v621
    %660 = vmatprep.subr.bf16.mxu0 0
    %661 = vmatpush1.bf16.msra.mxu0 %v620
    %662 = vmatprep.subr.bf16.mxu0 0
    %663 = vmatpush1.bf16.msra.mxu0 %v619
    %664 = vmatprep.subr.bf16.mxu0 0
    %665 = vmatpush1.bf16.msra.mxu0 %v618
    %666 = vmatprep.subr.bf16.mxu0 0
    %667 = vmatpush2.bf16.msra.mxu0 %v633
    %668 = vmatprep.subr.bf16.mxu0 0
    %669 = vmatpush2.bf16.msra.mxu0 %v632
    %670 = vmatprep.subr.bf16.mxu0 0
    %671 = vmatpush2.bf16.msra.mxu0 %v631
    %672 = vmatprep.subr.bf16.mxu0 0
    %673 = vmatpush2.bf16.msra.mxu0 %v630
    %674 = vmatprep.subr.bf16.mxu0 0
    %675 = vmatpush2.bf16.msra.mxu0 %v629
    %676 = vmatprep.subr.bf16.mxu0 0
    %677 = vmatpush2.bf16.msra.mxu0 %v628
    %678 = vmatprep.subr.bf16.mxu0 0
    %679 = vmatpush2.bf16.msra.mxu0 %v627
    %680 = vmatprep.subr.bf16.mxu0 0
    %681 = vmatpush2.bf16.msra.mxu0 %v626
    %682 = vmatprep.mubr.bf16.mxu0 %v500
    %683 = vmatmul.mubr.bf16.gmra.mxu0 %v499
    %v684 = vpop.f32.mrf.mxu0
    %v685 = vadd.f32 %v552, %v684
    %v686 = vpop.f32.mrf.mxu0
    %v687 = vpop.f32.mrf.mxu0
    %v688 = vadd.f32 %v552, %v687
    %v689 = vpop.f32.mrf.mxu0
    %690 = vmatprep.mubr.bf16.mxu0 %v502
    %691 = vmatmul.mubr.bf16.gmra.mxu0 %v501
    %v692 = vpop.f32.mrf.mxu0
    %v693 = vadd.f32 %v552, %v692
    %v694 = vpop.f32.mrf.mxu0
    %v695 = vpop.f32.mrf.mxu0
    %v696 = vadd.f32 %v552, %v695
    %v697 = vpop.f32.mrf.mxu0
    %698 = vmatprep.mubr.bf16.mxu0 %v504
    %699 = vmatmul.mubr.bf16.gmra.mxu0 %v503
    %v700 = vpop.f32.mrf.mxu0
    %v701 = vadd.f32 %v552, %v700
    %v702 = vpop.f32.mrf.mxu0
    %v703 = vpop.f32.mrf.mxu0
    %v704 = vadd.f32 %v552, %v703
    %v705 = vpop.f32.mrf.mxu0
    %706 = vmatprep.mubr.bf16.mxu0 %v506
    %707 = vmatmul.mubr.bf16.gmra.mxu0 %v505
    %v708 = vpop.f32.mrf.mxu0
    %v709 = vadd.f32 %v552, %v708
    %v710 = vpop.f32.mrf.mxu0
    %v711 = vpop.f32.mrf.mxu0
    %v712 = vadd.f32 %v552, %v711
    %v713 = vpop.f32.mrf.mxu0
    %714 = vmatprep.mubr.bf16.mxu0 %v508
    %715 = vmatmul.mubr.bf16.gmra.mxu0 %v507
    %v716 = vpop.f32.mrf.mxu0
    %v717 = vadd.f32 %v552, %v716
    %v718 = vpop.f32.mrf.mxu0
    %v719 = vpop.f32.mrf.mxu0
    %v720 = vadd.f32 %v552, %v719
    %v721 = vpop.f32.mrf.mxu0
    %722 = vmatprep.mubr.bf16.mxu0 %v510
    %723 = vmatmul.mubr.bf16.gmra.mxu0 %v509
    %v724 = vpop.f32.mrf.mxu0
    %v725 = vadd.f32 %v552, %v724
    %v726 = vpop.f32.mrf.mxu0
    %v727 = vpop.f32.mrf.mxu0
    %v728 = vadd.f32 %v552, %v727
    %v729 = vpop.f32.mrf.mxu0
    %730 = vmatprep.mubr.bf16.mxu0 %v512
    %731 = vmatmul.mubr.bf16.gmra.mxu0 %v511
    %v732 = vpop.f32.mrf.mxu0
    %v733 = vadd.f32 %v552, %v732
    %v734 = vpop.f32.mrf.mxu0
    %v735 = vpop.f32.mrf.mxu0
    %v736 = vadd.f32 %v552, %v735
    %v737 = vpop.f32.mrf.mxu0
    %738 = vmatprep.mubr.bf16.mxu0 %v514
    %739 = vmatmul.mubr.bf16.gmra.mxu0 %v513
    %v740 = vpop.f32.mrf.mxu0
    %v741 = vadd.f32 %v552, %v740
    %v742 = vpop.f32.mrf.mxu0
    %v743 = vpop.f32.mrf.mxu0
    %v744 = vadd.f32 %v552, %v743
    %v745 = vpop.f32.mrf.mxu0
    %746 = vdwg.mxu0
    %747 = vst [vmem:[%s5] sm:$0xff] %v685
    %748 = vst [vmem:[%s5 + $0x8] sm:$0xff] %v688
    %749 = vst [vmem:[%s5 + $0x10] sm:$0xff] %v693
    %750 = vst [vmem:[%s5 + $0x18] sm:$0xff] %v696
    %751 = vst [vmem:[%s5 + $0x20] sm:$0xff] %v701
    %752 = vst [vmem:[%s5 + $0x28] sm:$0xff] %v704
    %753 = vst [vmem:[%s5 + $0x30] sm:$0xff] %v709
    %754 = vst [vmem:[%s5 + $0x38] sm:$0xff] %v712
    %755 = vst [vmem:[%s5 + $0x40] sm:$0xff] %v717
    %756 = vst [vmem:[%s5 + $0x48] sm:$0xff] %v720
    %757 = vst [vmem:[%s5 + $0x50] sm:$0xff] %v725
    %758 = vst [vmem:[%s5 + $0x58] sm:$0xff] %v728
    %759 = vst [vmem:[%s5 + $0x60] sm:$0xff] %v733
    %760 = vst [vmem:[%s5 + $0x68] sm:$0xff] %v736
    %761 = vst [vmem:[%s5 + $0x70] sm:$0xff] %v741
    %762 = vst [vmem:[%s5 + $0x78] sm:$0xff] %v744
  $region29: #{graphsage_forward.3} parent=0 // pred_fallthru
    _
  // Predicated region
  $region30: #{graphsage_forward.3} parent=0 // pred_check
    _
  $region31: #{graphsage_forward.3} parent=0 // pred_check_branch
    %764 = sbr.rel (0) target = $region33
  $region32: #{graphsage_forward.3} parent=0 // pred_region
    _
  $region33: #{graphsage_forward.3} parent=0 // pred_fallthru
    _
  // Predicated region
  $region34: #{graphsage_forward.3} parent=0 // pred_check
    _
  $region35: #{graphsage_forward.3} parent=0 // pred_check_branch
    %766 = sbr.rel (0) target = $region37
  $region36: #{graphsage_forward.3} parent=0 // pred_region
    _
  $region37: #{graphsage_forward.3} parent=0 // pred_fallthru
    _

// kernel: graphsage_forward.2
$region0: #{graphsage_forward.2}
  #allocation0 [shape = 'u32[]', space=smem, size = 0x4, offset = 0x4, fixed_abs, tag = 'smem constant byte address 0x4 - core index']
  #allocation1 [shape = 'u32[144,128]{1,0:T(1,128)}', space=vmem, size = 0x12000, scoped, tag = 'internal scratch']
  #allocation2 [shape = 'f32[128,256]{1,0:T(8,128)}', space=vmem, size = 0x20000, scoped, tag = 'scratch operand']
  %s0 = inlined_call_operand.vmem [shape: s8[128,128], index: 0, kind: input, shape index: {}]
  %s1 = inlined_call_operand.vmem [shape: bf16[128,128], index: 1, kind: input, shape index: {}]
  %s2 = inlined_call_operand.vmem [shape: f32[128,1], index: 2, kind: input, shape index: {}]
  %s3 = inlined_call_operand.vmem [shape: bf16[256,128], index: 3, kind: input, shape index: {}]
  %s4 = inlined_call_operand.vmem [shape: f32[1,128], index: 4, kind: input, shape index: {}]
  %s5 = inlined_call_operand.vmem [shape: bf16[128,128], index: 5, kind: output, shape index: {}]
  %s6 = sld [smem:[#allocation0]]
  $region38: #{graphsage_forward.2} parent=0
    _
  %s8 = ssub.s32 1, %s6
  %s9 = scalar_select 0, %s8, %s6
  // Predicated region
  $region2: #{graphsage_forward.2} parent=0 // pred_check
    _
  $region3: #{graphsage_forward.2} parent=0 // pred_check_branch
    %11 = sbr.rel (0) target = $region5
  $region4: #{graphsage_forward.2} parent=0 // pred_region
    _
  $region5: #{graphsage_forward.2} parent=0 // pred_fallthru
    _
  // Predicated region
  $region6: #{graphsage_forward.2} parent=0 // pred_check
    _
  $region7: #{graphsage_forward.2} parent=0 // pred_check_branch
    %13 = sbr.rel (0) target = $region9
  $region8: #{graphsage_forward.2} parent=0 // pred_region
    _
  $region9: #{graphsage_forward.2} parent=0 // pred_fallthru
    _
  // Predicated region
  $region10: #{graphsage_forward.2} parent=0 // pred_check
    _
  $region11: #{graphsage_forward.2} parent=0 // pred_check_branch
    %15 = sbr.rel (0) target = $region13
  $region12: #{graphsage_forward.2} parent=0 // pred_region
    _
  $region13: #{graphsage_forward.2} parent=0 // pred_fallthru
    _
  // Predicated region
  $region14: #{graphsage_forward.2} parent=0 // pred_check
    _
  $region15: #{graphsage_forward.2} parent=0 // pred_check_branch
    %17 = sbr.rel (0) target = $region17
  $region16: #{graphsage_forward.2} parent=0 // pred_region
    _
  $region17: #{graphsage_forward.2} parent=0 // pred_fallthru
    _
  // Predicated region
  $region18: #{graphsage_forward.2} parent=0 // pred_check
    _
  $region19: #{graphsage_forward.2} parent=0 // pred_check_branch
    %19 = sbr.rel (0) target = $region21
  $region20: #{graphsage_forward.2} parent=0 // pred_region
    _
  $region21: #{graphsage_forward.2} parent=0 // pred_fallthru
    _
  %p21 = scmp.eq.s32.totalorder 0, 0
  // Predicated region
  $region22: #{graphsage_forward.2} parent=0 // pred_check
    %p22 = pneg %p21
  $region23: #{graphsage_forward.2} parent=0 // pred_check_branch
    %24 = sbr.rel (%p22) target = $region25
  $region24: #{graphsage_forward.2} parent=0 // pred_region
    %25 = vst [vmem:[#allocation2] sm:$0xff] 0.0
    %26 = vst [vmem:[#allocation2 + $0x10] sm:$0xff] 0.0
    %27 = vst [vmem:[#allocation2 + $0x20] sm:$0xff] 0.0
    %28 = vst [vmem:[#allocation2 + $0x30] sm:$0xff] 0.0
    %29 = vst [vmem:[#allocation2 + $0x40] sm:$0xff] 0.0
    %30 = vst [vmem:[#allocation2 + $0x50] sm:$0xff] 0.0
    %31 = vst [vmem:[#allocation2 + $0x60] sm:$0xff] 0.0
    %32 = vst [vmem:[#allocation2 + $0x70] sm:$0xff] 0.0
    %33 = vst [vmem:[#allocation2 + $0x80] sm:$0xff] 0.0
    %34 = vst [vmem:[#allocation2 + $0x90] sm:$0xff] 0.0
    %35 = vst [vmem:[#allocation2 + $0xa0] sm:$0xff] 0.0
    %36 = vst [vmem:[#allocation2 + $0xb0] sm:$0xff] 0.0
    %37 = vst [vmem:[#allocation2 + $0xc0] sm:$0xff] 0.0
    %38 = vst [vmem:[#allocation2 + $0xd0] sm:$0xff] 0.0
    %39 = vst [vmem:[#allocation2 + $0xe0] sm:$0xff] 0.0
    %40 = vst [vmem:[#allocation2 + $0xf0] sm:$0xff] 0.0
    %s41 = smul.u32 0, 128
    %s42 = sshra.s32 %s41, 3
    %s43 = sand.u32 %s41, 7
    %s44 = smul.addr %s42, 4
    %s45 = scalar_lea.vmem %s1, %s44
    %v46 = vld [vmem:[%s45] sm:$0xf]
    %v47 = vld [vmem:[%s45 + $0x4] sm:$0xf]
    %v48 = vld [vmem:[%s45 + $0x8] sm:$0xf]
    %v49 = vld [vmem:[%s45 + $0xc] sm:$0xf]
    %v50 = vld [vmem:[%s45 + $0x10] sm:$0xf]
    %v51 = vld [vmem:[%s45 + $0x14] sm:$0xf]
    %v52 = vld [vmem:[%s45 + $0x18] sm:$0xf]
    %v53 = vld [vmem:[%s45 + $0x1c] sm:$0xf]
    %v54 = vld [vmem:[%s45 + $0x20] sm:$0xf]
    %v55 = vld [vmem:[%s45 + $0x24] sm:$0xf]
    %v56 = vld [vmem:[%s45 + $0x28] sm:$0xf]
    %v57 = vld [vmem:[%s45 + $0x2c] sm:$0xf]
    %v58 = vld [vmem:[%s45 + $0x30] sm:$0xf]
    %v59 = vld [vmem:[%s45 + $0x34] sm:$0xf]
    %v60 = vld [vmem:[%s45 + $0x38] sm:$0xf]
    %v61 = vld [vmem:[%s45 + $0x3c] sm:$0xf]
    %v62 = vunpack.c.l.bf16 %v46
    %v63 = vunpack.c.l.bf16 %v47
    %v64 = vunpack.c.l.bf16 %v48
    %v65 = vunpack.c.l.bf16 %v49
    %v66 = vunpack.c.l.bf16 %v50
    %v67 = vunpack.c.l.bf16 %v51
    %v68 = vunpack.c.l.bf16 %v52
    %v69 = vunpack.c.l.bf16 %v53
    %v70 = vunpack.c.l.bf16 %v54
    %v71 = vunpack.c.l.bf16 %v55
    %v72 = vunpack.c.l.bf16 %v56
    %v73 = vunpack.c.l.bf16 %v57
    %v74 = vunpack.c.l.bf16 %v58
    %v75 = vunpack.c.l.bf16 %v59
    %v76 = vunpack.c.l.bf16 %v60
    %v77 = vunpack.c.l.bf16 %v61
    %78 = vst [vmem:[#allocation2 + $0x8] sm:$0xff] %v62
    %79 = vst [vmem:[#allocation2 + $0x18] sm:$0xff] %v63
    %80 = vst [vmem:[#allocation2 + $0x28] sm:$0xff] %v64
    %81 = vst [vmem:[#allocation2 + $0x38] sm:$0xff] %v65
    %82 = vst [vmem:[#allocation2 + $0x48] sm:$0xff] %v66
    %83 = vst [vmem:[#allocation2 + $0x58] sm:$0xff] %v67
    %84 = vst [vmem:[#allocation2 + $0x68] sm:$0xff] %v68
    %85 = vst [vmem:[#allocation2 + $0x78] sm:$0xff] %v69
    %86 = vst [vmem:[#allocation2 + $0x88] sm:$0xff] %v70
    %87 = vst [vmem:[#allocation2 + $0x98] sm:$0xff] %v71
    %88 = vst [vmem:[#allocation2 + $0xa8] sm:$0xff] %v72
    %89 = vst [vmem:[#allocation2 + $0xb8] sm:$0xff] %v73
    %90 = vst [vmem:[#allocation2 + $0xc8] sm:$0xff] %v74
    %91 = vst [vmem:[#allocation2 + $0xd8] sm:$0xff] %v75
    %92 = vst [vmem:[#allocation2 + $0xe8] sm:$0xff] %v76
    %93 = vst [vmem:[#allocation2 + $0xf8] sm:$0xff] %v77
  $region25: #{graphsage_forward.2} parent=0 // pred_fallthru
    _
  %s94 = smul.u32 0, 128
  %v95 = vld [vmem:[#allocation2] sm:$0xff]
  %v96 = vld [vmem:[#allocation2 + $0x10] sm:$0xff]
  %v97 = vld [vmem:[#allocation2 + $0x20] sm:$0xff]
  %v98 = vld [vmem:[#allocation2 + $0x30] sm:$0xff]
  %v99 = vld [vmem:[#allocation2 + $0x40] sm:$0xff]
  %v100 = vld [vmem:[#allocation2 + $0x50] sm:$0xff]
  %v101 = vld [vmem:[#allocation2 + $0x60] sm:$0xff]
  %v102 = vld [vmem:[#allocation2 + $0x70] sm:$0xff]
  %v103 = vld [vmem:[#allocation2 + $0x80] sm:$0xff]
  %v104 = vld [vmem:[#allocation2 + $0x90] sm:$0xff]
  %v105 = vld [vmem:[#allocation2 + $0xa0] sm:$0xff]
  %v106 = vld [vmem:[#allocation2 + $0xb0] sm:$0xff]
  %v107 = vld [vmem:[#allocation2 + $0xc0] sm:$0xff]
  %v108 = vld [vmem:[#allocation2 + $0xd0] sm:$0xff]
  %v109 = vld [vmem:[#allocation2 + $0xe0] sm:$0xff]
  %v110 = vld [vmem:[#allocation2 + $0xf0] sm:$0xff]
  %v111 = vld [vmem:[%s0] sm:$0xff]
  %v112 = vld [vmem:[%s0 + $0x8] sm:$0xff]
  %v113 = vld [vmem:[%s0 + $0x10] sm:$0xff]
  %v114 = vld [vmem:[%s0 + $0x18] sm:$0xff]
  %v115 = vunpack.c.l.s8.bf16 %v111
  %v116 = vunpack.c.h.s8.bf16 %v111
  %v117 = vunpack.c.l.s8.bf16 %v112
  %v118 = vunpack.c.h.s8.bf16 %v112
  %v119 = vunpack.c.l.s8.bf16 %v113
  %v120 = vunpack.c.h.s8.bf16 %v113
  %v121 = vunpack.c.l.s8.bf16 %v114
  %v122 = vunpack.c.h.s8.bf16 %v114
  %s123 = sshra.s32 %s94, 3
  %s124 = sand.u32 %s94, 7
  %s125 = smul.addr %s123, 4
  %s126 = scalar_lea.vmem %s1, %s125
  %v127 = vld [vmem:[%s126] sm:$0xf]
  %v128 = vld [vmem:[%s126 + $0x4] sm:$0xf]
  %v129 = vld [vmem:[%s126 + $0x8] sm:$0xf]
  %v130 = vld [vmem:[%s126 + $0xc] sm:$0xf]
  %v131 = vld [vmem:[%s126 + $0x10] sm:$0xf]
  %v132 = vld [vmem:[%s126 + $0x14] sm:$0xf]
  %v133 = vld [vmem:[%s126 + $0x18] sm:$0xf]
  %v134 = vld [vmem:[%s126 + $0x1c] sm:$0xf]
  %v135 = vld [vmem:[%s126 + $0x20] sm:$0xf]
  %v136 = vld [vmem:[%s126 + $0x24] sm:$0xf]
  %v137 = vld [vmem:[%s126 + $0x28] sm:$0xf]
  %v138 = vld [vmem:[%s126 + $0x2c] sm:$0xf]
  %v139 = vld [vmem:[%s126 + $0x30] sm:$0xf]
  %v140 = vld [vmem:[%s126 + $0x34] sm:$0xf]
  %v141 = vld [vmem:[%s126 + $0x38] sm:$0xf]
  %v142 = vld [vmem:[%s126 + $0x3c] sm:$0xf]
  %v159 = vunpack.c.l.b16 %v127
  %v160 = vunpack.c.l.b16 %v128
  %v161 = vunpack.c.l.b16 %v129
  %v162 = vunpack.c.l.b16 %v130
  %v163 = vunpack.c.l.b16 %v131
  %v164 = vunpack.c.l.b16 %v132
  %v165 = vunpack.c.l.b16 %v133
  %v166 = vunpack.c.l.b16 %v134
  %v167 = vunpack.c.l.b16 %v135
  %v168 = vunpack.c.l.b16 %v136
  %v169 = vunpack.c.l.b16 %v137
  %v170 = vunpack.c.l.b16 %v138
  %v171 = vunpack.c.l.b16 %v139
  %v172 = vunpack.c.l.b16 %v140
  %v173 = vunpack.c.l.b16 %v141
  %v174 = vunpack.c.l.b16 %v142
  %v175 = vpack.c.b16 %v160, %v159
  %v176 = vpack.c.b16 %v162, %v161
  %v177 = vpack.c.b16 %v164, %v163
  %v178 = vpack.c.b16 %v166, %v165
  %v179 = vpack.c.b16 %v168, %v167
  %v180 = vpack.c.b16 %v170, %v169
  %v181 = vpack.c.b16 %v172, %v171
  %v182 = vpack.c.b16 %v174, %v173
  %191 = vmatprep.subr.bf16.mxu0 0
  %192 = vmatpush1.bf16.msra.mxu0 %v182
  %193 = vmatprep.subr.bf16.mxu0 0
  %194 = vmatpush1.bf16.msra.mxu0 %v181
  %195 = vmatprep.subr.bf16.mxu0 0
  %196 = vmatpush1.bf16.msra.mxu0 %v180
  %197 = vmatprep.subr.bf16.mxu0 0
  %198 = vmatpush1.bf16.msra.mxu0 %v179
  %199 = vmatprep.subr.bf16.mxu0 0
  %200 = vmatpush1.bf16.msra.mxu0 %v178
  %201 = vmatprep.subr.bf16.mxu0 0
  %202 = vmatpush1.bf16.msra.mxu0 %v177
  %203 = vmatprep.subr.bf16.mxu0 0
  %204 = vmatpush1.bf16.msra.mxu0 %v176
  %205 = vmatprep.subr.bf16.mxu0 0
  %206 = vmatpush1.bf16.msra.mxu0 %v175
  %207 = vmatprep.subr.bf16.mxu0 0
  %208 = vmatpush2.bf16.msra.mxu0 0
  %209 = vmatprep.subr.bf16.mxu0 0
  %210 = vmatpush2.bf16.msra.mxu0 0
  %211 = vmatprep.subr.bf16.mxu0 0
  %212 = vmatpush2.bf16.msra.mxu0 0
  %213 = vmatprep.subr.bf16.mxu0 0
  %214 = vmatpush2.bf16.msra.mxu0 0
  %215 = vmatprep.subr.bf16.mxu0 0
  %216 = vmatpush2.bf16.msra.mxu0 0
  %217 = vmatprep.subr.bf16.mxu0 0
  %218 = vmatpush2.bf16.msra.mxu0 0
  %219 = vmatprep.subr.bf16.mxu0 0
  %220 = vmatpush2.bf16.msra.mxu0 0
  %221 = vmatprep.subr.bf16.mxu0 0
  %222 = vmatpush2.bf16.msra.mxu0 0
  %223 = vmatprep.mubr.bf16.mxu0 0
  %224 = vmatmul.mubr.bf16.gmra.mxu0 %v115
  %v225 = vpop.f32.mrf.mxu0
  %v226 = vadd.f32 0.0, %v225
  %v227 = vpop.f32.mrf.mxu0
  %v228 = vpop.f32.mrf.mxu0
  %v229 = vadd.f32 0.0, %v228
  %v230 = vpop.f32.mrf.mxu0
  %231 = vmatprep.mubr.bf16.mxu0 0
  %232 = vmatmul.mubr.bf16.gmra.mxu0 %v116
  %v233 = vpop.f32.mrf.mxu0
  %v234 = vadd.f32 0.0, %v233
  %v235 = vpop.f32.mrf.mxu0
  %v236 = vpop.f32.mrf.mxu0
  %v237 = vadd.f32 0.0, %v236
  %v238 = vpop.f32.mrf.mxu0
  %239 = vmatprep.mubr.bf16.mxu0 0
  %240 = vmatmul.mubr.bf16.gmra.mxu0 %v117
  %v241 = vpop.f32.mrf.mxu0
  %v242 = vadd.f32 0.0, %v241
  %v243 = vpop.f32.mrf.mxu0
  %v244 = vpop.f32.mrf.mxu0
  %v245 = vadd.f32 0.0, %v244
  %v246 = vpop.f32.mrf.mxu0
  %247 = vmatprep.mubr.bf16.mxu0 0
  %248 = vmatmul.mubr.bf16.gmra.mxu0 %v118
  %v249 = vpop.f32.mrf.mxu0
  %v250 = vadd.f32 0.0, %v249
  %v251 = vpop.f32.mrf.mxu0
  %v252 = vpop.f32.mrf.mxu0
  %v253 = vadd.f32 0.0, %v252
  %v254 = vpop.f32.mrf.mxu0
  %255 = vmatprep.mubr.bf16.mxu0 0
  %256 = vmatmul.mubr.bf16.gmra.mxu0 %v119
  %v257 = vpop.f32.mrf.mxu0
  %v258 = vadd.f32 0.0, %v257
  %v259 = vpop.f32.mrf.mxu0
  %v260 = vpop.f32.mrf.mxu0
  %v261 = vadd.f32 0.0, %v260
  %v262 = vpop.f32.mrf.mxu0
  %263 = vmatprep.mubr.bf16.mxu0 0
  %264 = vmatmul.mubr.bf16.gmra.mxu0 %v120
  %v265 = vpop.f32.mrf.mxu0
  %v266 = vadd.f32 0.0, %v265
  %v267 = vpop.f32.mrf.mxu0
  %v268 = vpop.f32.mrf.mxu0
  %v269 = vadd.f32 0.0, %v268
  %v270 = vpop.f32.mrf.mxu0
  %271 = vmatprep.mubr.bf16.mxu0 0
  %272 = vmatmul.mubr.bf16.gmra.mxu0 %v121
  %v273 = vpop.f32.mrf.mxu0
  %v274 = vadd.f32 0.0, %v273
  %v275 = vpop.f32.mrf.mxu0
  %v276 = vpop.f32.mrf.mxu0
  %v277 = vadd.f32 0.0, %v276
  %v278 = vpop.f32.mrf.mxu0
  %279 = vmatprep.mubr.bf16.mxu0 0
  %280 = vmatmul.mubr.bf16.gmra.mxu0 %v122
  %v281 = vpop.f32.mrf.mxu0
  %v282 = vadd.f32 0.0, %v281
  %v283 = vpop.f32.mrf.mxu0
  %v284 = vpop.f32.mrf.mxu0
  %v285 = vadd.f32 0.0, %v284
  %v286 = vpop.f32.mrf.mxu0
  %287 = vdwg.mxu0
  %v288 = vadd.f32 %v95, %v226
  %v289 = vadd.f32 %v96, %v229
  %v290 = vadd.f32 %v97, %v234
  %v291 = vadd.f32 %v98, %v237
  %v292 = vadd.f32 %v99, %v242
  %v293 = vadd.f32 %v100, %v245
  %v294 = vadd.f32 %v101, %v250
  %v295 = vadd.f32 %v102, %v253
  %v296 = vadd.f32 %v103, %v258
  %v297 = vadd.f32 %v104, %v261
  %v298 = vadd.f32 %v105, %v266
  %v299 = vadd.f32 %v106, %v269
  %v300 = vadd.f32 %v107, %v274
  %v301 = vadd.f32 %v108, %v277
  %v302 = vadd.f32 %v109, %v282
  %v303 = vadd.f32 %v110, %v285
  %304 = vst [vmem:[#allocation2] sm:$0xff] %v288
  %305 = vst [vmem:[#allocation2 + $0x10] sm:$0xff] %v289
  %306 = vst [vmem:[#allocation2 + $0x20] sm:$0xff] %v290
  %307 = vst [vmem:[#allocation2 + $0x30] sm:$0xff] %v291
  %308 = vst [vmem:[#allocation2 + $0x40] sm:$0xff] %v292
  %309 = vst [vmem:[#allocation2 + $0x50] sm:$0xff] %v293
  %310 = vst [vmem:[#allocation2 + $0x60] sm:$0xff] %v294
  %311 = vst [vmem:[#allocation2 + $0x70] sm:$0xff] %v295
  %312 = vst [vmem:[#allocation2 + $0x80] sm:$0xff] %v296
  %313 = vst [vmem:[#allocation2 + $0x90] sm:$0xff] %v297
  %314 = vst [vmem:[#allocation2 + $0xa0] sm:$0xff] %v298
  %315 = vst [vmem:[#allocation2 + $0xb0] sm:$0xff] %v299
  %316 = vst [vmem:[#allocation2 + $0xc0] sm:$0xff] %v300
  %317 = vst [vmem:[#allocation2 + $0xd0] sm:$0xff] %v301
  %318 = vst [vmem:[#allocation2 + $0xe0] sm:$0xff] %v302
  %319 = vst [vmem:[#allocation2 + $0xf0] sm:$0xff] %v303
  // Predicated region
  $region26: #{graphsage_forward.2} parent=0 // pred_check
    %p320 = pneg %p21
  $region27: #{graphsage_forward.2} parent=0 // pred_check_branch
    %322 = sbr.rel (%p320) target = $region29
  $region28: #{graphsage_forward.2} parent=0 // pred_region
    %v323 = vld [vmem:[#allocation2] sm:$0xff]
    %v324 = vld [vmem:[#allocation2 + $0x10] sm:$0xff]
    %v325 = vld [vmem:[#allocation2 + $0x20] sm:$0xff]
    %v326 = vld [vmem:[#allocation2 + $0x30] sm:$0xff]
    %v327 = vld [vmem:[#allocation2 + $0x40] sm:$0xff]
    %v328 = vld [vmem:[#allocation2 + $0x50] sm:$0xff]
    %v329 = vld [vmem:[#allocation2 + $0x60] sm:$0xff]
    %v330 = vld [vmem:[#allocation2 + $0x70] sm:$0xff]
    %v331 = vld [vmem:[#allocation2 + $0x80] sm:$0xff]
    %v332 = vld [vmem:[#allocation2 + $0x90] sm:$0xff]
    %v333 = vld [vmem:[#allocation2 + $0xa0] sm:$0xff]
    %v334 = vld [vmem:[#allocation2 + $0xb0] sm:$0xff]
    %v335 = vld [vmem:[#allocation2 + $0xc0] sm:$0xff]
    %v336 = vld [vmem:[#allocation2 + $0xd0] sm:$0xff]
    %v337 = vld [vmem:[#allocation2 + $0xe0] sm:$0xff]
    %v338 = vld [vmem:[#allocation2 + $0xf0] sm:$0xff]
    %v339 = vld [vmem:[%s2] sm:$0xff]
    %v340 = vld [vmem:[%s2 + $0x8] sm:$0xff]
    %v341 = vld [vmem:[%s2 + $0x10] sm:$0xff]
    %v342 = vld [vmem:[%s2 + $0x18] sm:$0xff]
    %v343 = vld [vmem:[%s2 + $0x20] sm:$0xff]
    %v344 = vld [vmem:[%s2 + $0x28] sm:$0xff]
    %v345 = vld [vmem:[%s2 + $0x30] sm:$0xff]
    %v346 = vld [vmem:[%s2 + $0x38] sm:$0xff]
    %v347 = vld [vmem:[%s2 + $0x40] sm:$0xff]
    %v348 = vld [vmem:[%s2 + $0x48] sm:$0xff]
    %v349 = vld [vmem:[%s2 + $0x50] sm:$0xff]
    %v350 = vld [vmem:[%s2 + $0x58] sm:$0xff]
    %v351 = vld [vmem:[%s2 + $0x60] sm:$0xff]
    %v352 = vld [vmem:[%s2 + $0x68] sm:$0xff]
    %v353 = vld [vmem:[%s2 + $0x70] sm:$0xff]
    %v354 = vld [vmem:[%s2 + $0x78] sm:$0xff]
    %356 = vset.pattern.permute.xlu0 0
    %357 = vperm.xlu0 %356, %v339
    %v358 = vpop.permute.xlu0 %357
    %361 = vset.pattern.permute.xlu0 0
    %362 = vperm.xlu0 %361, %v340
    %v363 = vpop.permute.xlu0 %362
    %366 = vset.pattern.permute.xlu0 0
    %367 = vperm.xlu0 %366, %v341
    %v368 = vpop.permute.xlu0 %367
    %371 = vset.pattern.permute.xlu0 0
    %372 = vperm.xlu0 %371, %v342
    %v373 = vpop.permute.xlu0 %372
    %376 = vset.pattern.permute.xlu0 0
    %377 = vperm.xlu0 %376, %v343
    %v378 = vpop.permute.xlu0 %377
    %381 = vset.pattern.permute.xlu0 0
    %382 = vperm.xlu0 %381, %v344
    %v383 = vpop.permute.xlu0 %382
    %386 = vset.pattern.permute.xlu0 0
    %387 = vperm.xlu0 %386, %v345
    %v388 = vpop.permute.xlu0 %387
    %391 = vset.pattern.permute.xlu0 0
    %392 = vperm.xlu0 %391, %v346
    %v393 = vpop.permute.xlu0 %392
    %396 = vset.pattern.permute.xlu0 0
    %397 = vperm.xlu0 %396, %v347
    %v398 = vpop.permute.xlu0 %397
    %401 = vset.pattern.permute.xlu0 0
    %402 = vperm.xlu0 %401, %v348
    %v403 = vpop.permute.xlu0 %402
    %406 = vset.pattern.permute.xlu0 0
    %407 = vperm.xlu0 %406, %v349
    %v408 = vpop.permute.xlu0 %407
    %411 = vset.pattern.permute.xlu0 0
    %412 = vperm.xlu0 %411, %v350
    %v413 = vpop.permute.xlu0 %412
    %416 = vset.pattern.permute.xlu0 0
    %417 = vperm.xlu0 %416, %v351
    %v418 = vpop.permute.xlu0 %417
    %421 = vset.pattern.permute.xlu0 0
    %422 = vperm.xlu0 %421, %v352
    %v423 = vpop.permute.xlu0 %422
    %426 = vset.pattern.permute.xlu0 0
    %427 = vperm.xlu0 %426, %v353
    %v428 = vpop.permute.xlu0 %427
    %431 = vset.pattern.permute.xlu0 0
    %432 = vperm.xlu0 %431, %v354
    %v433 = vpop.permute.xlu0 %432
    %v435 = vmul.f32 %v323, %v358
    %v436 = vmul.f32 %v324, %v363
    %v437 = vmul.f32 %v325, %v368
    %v438 = vmul.f32 %v326, %v373
    %v439 = vmul.f32 %v327, %v378
    %v440 = vmul.f32 %v328, %v383
    %v441 = vmul.f32 %v329, %v388
    %v442 = vmul.f32 %v330, %v393
    %v443 = vmul.f32 %v331, %v398
    %v444 = vmul.f32 %v332, %v403
    %v445 = vmul.f32 %v333, %v408
    %v446 = vmul.f32 %v334, %v413
    %v447 = vmul.f32 %v335, %v418
    %v448 = vmul.f32 %v336, %v423
    %v449 = vmul.f32 %v337, %v428
    %v450 = vmul.f32 %v338, %v433
    %451 = vst [vmem:[#allocation2] sm:$0xff] %v435
    %452 = vst [vmem:[#allocation2 + $0x10] sm:$0xff] %v436
    %453 = vst [vmem:[#allocation2 + $0x20] sm:$0xff] %v437
    %454 = vst [vmem:[#allocation2 + $0x30] sm:$0xff] %v438
    %455 = vst [vmem:[#allocation2 + $0x40] sm:$0xff] %v439
    %456 = vst [vmem:[#allocation2 + $0x50] sm:$0xff] %v440
    %457 = vst [vmem:[#allocation2 + $0x60] sm:$0xff] %v441
    %458 = vst [vmem:[#allocation2 + $0x70] sm:$0xff] %v442
    %459 = vst [vmem:[#allocation2 + $0x80] sm:$0xff] %v443
    %460 = vst [vmem:[#allocation2 + $0x90] sm:$0xff] %v444
    %461 = vst [vmem:[#allocation2 + $0xa0] sm:$0xff] %v445
    %462 = vst [vmem:[#allocation2 + $0xb0] sm:$0xff] %v446
    %463 = vst [vmem:[#allocation2 + $0xc0] sm:$0xff] %v447
    %464 = vst [vmem:[#allocation2 + $0xd0] sm:$0xff] %v448
    %465 = vst [vmem:[#allocation2 + $0xe0] sm:$0xff] %v449
    %466 = vst [vmem:[#allocation2 + $0xf0] sm:$0xff] %v450
    %v467 = vld [vmem:[#allocation2] sm:$0xff]
    %v468 = vld [vmem:[#allocation2 + $0x8] sm:$0xff]
    %v469 = vld [vmem:[#allocation2 + $0x10] sm:$0xff]
    %v470 = vld [vmem:[#allocation2 + $0x18] sm:$0xff]
    %v471 = vld [vmem:[#allocation2 + $0x20] sm:$0xff]
    %v472 = vld [vmem:[#allocation2 + $0x28] sm:$0xff]
    %v473 = vld [vmem:[#allocation2 + $0x30] sm:$0xff]
    %v474 = vld [vmem:[#allocation2 + $0x38] sm:$0xff]
    %v475 = vld [vmem:[#allocation2 + $0x40] sm:$0xff]
    %v476 = vld [vmem:[#allocation2 + $0x48] sm:$0xff]
    %v477 = vld [vmem:[#allocation2 + $0x50] sm:$0xff]
    %v478 = vld [vmem:[#allocation2 + $0x58] sm:$0xff]
    %v479 = vld [vmem:[#allocation2 + $0x60] sm:$0xff]
    %v480 = vld [vmem:[#allocation2 + $0x68] sm:$0xff]
    %v481 = vld [vmem:[#allocation2 + $0x70] sm:$0xff]
    %v482 = vld [vmem:[#allocation2 + $0x78] sm:$0xff]
    %v483 = vld [vmem:[#allocation2 + $0x80] sm:$0xff]
    %v484 = vld [vmem:[#allocation2 + $0x88] sm:$0xff]
    %v485 = vld [vmem:[#allocation2 + $0x90] sm:$0xff]
    %v486 = vld [vmem:[#allocation2 + $0x98] sm:$0xff]
    %v487 = vld [vmem:[#allocation2 + $0xa0] sm:$0xff]
    %v488 = vld [vmem:[#allocation2 + $0xa8] sm:$0xff]
    %v489 = vld [vmem:[#allocation2 + $0xb0] sm:$0xff]
    %v490 = vld [vmem:[#allocation2 + $0xb8] sm:$0xff]
    %v491 = vld [vmem:[#allocation2 + $0xc0] sm:$0xff]
    %v492 = vld [vmem:[#allocation2 + $0xc8] sm:$0xff]
    %v493 = vld [vmem:[#allocation2 + $0xd0] sm:$0xff]
    %v494 = vld [vmem:[#allocation2 + $0xd8] sm:$0xff]
    %v495 = vld [vmem:[#allocation2 + $0xe0] sm:$0xff]
    %v496 = vld [vmem:[#allocation2 + $0xe8] sm:$0xff]
    %v497 = vld [vmem:[#allocation2 + $0xf0] sm:$0xff]
    %v498 = vld [vmem:[#allocation2 + $0xf8] sm:$0xff]
    %v499 = vpack.c.bf16 %v469, %v467
    %v500 = vpack.c.bf16 %v470, %v468
    %v501 = vpack.c.bf16 %v473, %v471
    %v502 = vpack.c.bf16 %v474, %v472
    %v503 = vpack.c.bf16 %v477, %v475
    %v504 = vpack.c.bf16 %v478, %v476
    %v505 = vpack.c.bf16 %v481, %v479
    %v506 = vpack.c.bf16 %v482, %v480
    %v507 = vpack.c.bf16 %v485, %v483
    %v508 = vpack.c.bf16 %v486, %v484
    %v509 = vpack.c.bf16 %v489, %v487
    %v510 = vpack.c.bf16 %v490, %v488
    %v511 = vpack.c.bf16 %v493, %v491
    %v512 = vpack.c.bf16 %v494, %v492
    %v513 = vpack.c.bf16 %v497, %v495
    %v514 = vpack.c.bf16 %v498, %v496
    %v515 = vld [vmem:[%s3] sm:$0xf]
    %v516 = vld [vmem:[%s3 + $0x4] sm:$0xf]
    %v517 = vld [vmem:[%s3 + $0x8] sm:$0xf]
    %v518 = vld [vmem:[%s3 + $0xc] sm:$0xf]
    %v519 = vld [vmem:[%s3 + $0x10] sm:$0xf]
    %v520 = vld [vmem:[%s3 + $0x14] sm:$0xf]
    %v521 = vld [vmem:[%s3 + $0x18] sm:$0xf]
    %v522 = vld [vmem:[%s3 + $0x1c] sm:$0xf]
    %v523 = vld [vmem:[%s3 + $0x20] sm:$0xf]
    %v524 = vld [vmem:[%s3 + $0x24] sm:$0xf]
    %v525 = vld [vmem:[%s3 + $0x28] sm:$0xf]
    %v526 = vld [vmem:[%s3 + $0x2c] sm:$0xf]
    %v527 = vld [vmem:[%s3 + $0x30] sm:$0xf]
    %v528 = vld [vmem:[%s3 + $0x34] sm:$0xf]
    %v529 = vld [vmem:[%s3 + $0x38] sm:$0xf]
    %v530 = vld [vmem:[%s3 + $0x3c] sm:$0xf]
    %v531 = vld [vmem:[%s3 + $0x40] sm:$0xf]
    %v532 = vld [vmem:[%s3 + $0x44] sm:$0xf]
    %v533 = vld [vmem:[%s3 + $0x48] sm:$0xf]
    %v534 = vld [vmem:[%s3 + $0x4c] sm:$0xf]
    %v535 = vld [vmem:[%s3 + $0x50] sm:$0xf]
    %v536 = vld [vmem:[%s3 + $0x54] sm:$0xf]
    %v537 = vld [vmem:[%s3 + $0x58] sm:$0xf]
    %v538 = vld [vmem:[%s3 + $0x5c] sm:$0xf]
    %v539 = vld [vmem:[%s3 + $0x60] sm:$0xf]
    %v540 = vld [vmem:[%s3 + $0x64] sm:$0xf]
    %v541 = vld [vmem:[%s3 + $0x68] sm:$0xf]
    %v542 = vld [vmem:[%s3 + $0x6c] sm:$0xf]
    %v543 = vld [vmem:[%s3 + $0x70] sm:$0xf]
    %v544 = vld [vmem:[%s3 + $0x74] sm:$0xf]
    %v545 = vld [vmem:[%s3 + $0x78] sm:$0xf]
    %v546 = vld [vmem:[%s3 + $0x7c] sm:$0xf]
    %v547 = vld [vmem:[%s4] sm:$0x1]
    %v549 = vlaneseq
    %v550 = vshrl.u32 %v549, 7
    %v551 = vsub.s32 0, %v550
    %v552 = vrot.slane %v547, %v551
    %v586 = vunpack.c.l.b16 %v515
    %v587 = vunpack.c.l.b16 %v516
    %v588 = vunpack.c.l.b16 %v517
    %v589 = vunpack.c.l.b16 %v518
    %v590 = vunpack.c.l.b16 %v519
    %v591 = vunpack.c.l.b16 %v520
    %v592 = vunpack.c.l.b16 %v521
    %v593 = vunpack.c.l.b16 %v522
    %v594 = vunpack.c.l.b16 %v523
    %v595 = vunpack.c.l.b16 %v524
    %v596 = vunpack.c.l.b16 %v525
    %v597 = vunpack.c.l.b16 %v526
    %v598 = vunpack.c.l.b16 %v527
    %v599 = vunpack.c.l.b16 %v528
    %v600 = vunpack.c.l.b16 %v529
    %v601 = vunpack.c.l.b16 %v530
    %v602 = vunpack.c.l.b16 %v531
    %v603 = vunpack.c.l.b16 %v532
    %v604 = vunpack.c.l.b16 %v533
    %v605 = vunpack.c.l.b16 %v534
    %v606 = vunpack.c.l.b16 %v535
    %v607 = vunpack.c.l.b16 %v536
    %v608 = vunpack.c.l.b16 %v537
    %v609 = vunpack.c.l.b16 %v538
    %v610 = vunpack.c.l.b16 %v539
    %v611 = vunpack.c.l.b16 %v540
    %v612 = vunpack.c.l.b16 %v541
    %v613 = vunpack.c.l.b16 %v542
    %v614 = vunpack.c.l.b16 %v543
    %v615 = vunpack.c.l.b16 %v544
    %v616 = vunpack.c.l.b16 %v545
    %v617 = vunpack.c.l.b16 %v546
    %v618 = vpack.c.b16 %v587, %v586
    %v619 = vpack.c.b16 %v589, %v588
    %v620 = vpack.c.b16 %v591, %v590
    %v621 = vpack.c.b16 %v593, %v592
    %v622 = vpack.c.b16 %v595, %v594
    %v623 = vpack.c.b16 %v597, %v596
    %v624 = vpack.c.b16 %v599, %v598
    %v625 = vpack.c.b16 %v601, %v600
    %v626 = vpack.c.b16 %v603, %v602
    %v627 = vpack.c.b16 %v605, %v604
    %v628 = vpack.c.b16 %v607, %v606
    %v629 = vpack.c.b16 %v609, %v608
    %v630 = vpack.c.b16 %v611, %v610
    %v631 = vpack.c.b16 %v613, %v612
    %v632 = vpack.c.b16 %v615, %v614
    %v633 = vpack.c.b16 %v617, %v616
    %650 = vmatprep.subr.bf16.mxu0 0
    %651 = vmatpush1.bf16.msra.mxu0 %v625
    %652 = vmatprep.subr.bf16.mxu0 0
    %653 = vmatpush1.bf16.msra.mxu0 %v624
    %654 = vmatprep.subr.bf16.mxu0 0
    %655 = vmatpush1.bf16.msra.mxu0 %v623
    %656 = vmatprep.subr.bf16.mxu0 0
    %657 = vmatpush1.bf16.msra.mxu0 %v622
    %658 = vmatprep.subr.bf16.mxu0 0
    %659 = vmatpush1.bf16.msra.mxu0 %v621
    %660 = vmatprep.subr.bf16.mxu0 0
    %661 = vmatpush1.bf16.msra.mxu0 %v620
    %662 = vmatprep.subr.bf16.mxu0 0
    %663 = vmatpush1.bf16.msra.mxu0 %v619
    %664 = vmatprep.subr.bf16.mxu0 0
    %665 = vmatpush1.bf16.msra.mxu0 %v618
    %666 = vmatprep.subr.bf16.mxu0 0
    %667 = vmatpush2.bf16.msra.mxu0 %v633
    %668 = vmatprep.subr.bf16.mxu0 0
    %669 = vmatpush2.bf16.msra.mxu0 %v632
    %670 = vmatprep.subr.bf16.mxu0 0
    %671 = vmatpush2.bf16.msra.mxu0 %v631
    %672 = vmatprep.subr.bf16.mxu0 0
    %673 = vmatpush2.bf16.msra.mxu0 %v630
    %674 = vmatprep.subr.bf16.mxu0 0
    %675 = vmatpush2.bf16.msra.mxu0 %v629
    %676 = vmatprep.subr.bf16.mxu0 0
    %677 = vmatpush2.bf16.msra.mxu0 %v628
    %678 = vmatprep.subr.bf16.mxu0 0
    %679 = vmatpush2.bf16.msra.mxu0 %v627
    %680 = vmatprep.subr.bf16.mxu0 0
    %681 = vmatpush2.bf16.msra.mxu0 %v626
    %682 = vmatprep.mubr.bf16.mxu0 %v500
    %683 = vmatmul.mubr.bf16.gmra.mxu0 %v499
    %v684 = vpop.f32.mrf.mxu0
    %v685 = vadd.f32 %v552, %v684
    %v686 = vpop.f32.mrf.mxu0
    %v687 = vpop.f32.mrf.mxu0
    %v688 = vadd.f32 %v552, %v687
    %v689 = vpop.f32.mrf.mxu0
    %690 = vmatprep.mubr.bf16.mxu0 %v502
    %691 = vmatmul.mubr.bf16.gmra.mxu0 %v501
    %v692 = vpop.f32.mrf.mxu0
    %v693 = vadd.f32 %v552, %v692
    %v694 = vpop.f32.mrf.mxu0
    %v695 = vpop.f32.mrf.mxu0
    %v696 = vadd.f32 %v552, %v695
    %v697 = vpop.f32.mrf.mxu0
    %698 = vmatprep.mubr.bf16.mxu0 %v504
    %699 = vmatmul.mubr.bf16.gmra.mxu0 %v503
    %v700 = vpop.f32.mrf.mxu0
    %v701 = vadd.f32 %v552, %v700
    %v702 = vpop.f32.mrf.mxu0
    %v703 = vpop.f32.mrf.mxu0
    %v704 = vadd.f32 %v552, %v703
    %v705 = vpop.f32.mrf.mxu0
    %706 = vmatprep.mubr.bf16.mxu0 %v506
    %707 = vmatmul.mubr.bf16.gmra.mxu0 %v505
    %v708 = vpop.f32.mrf.mxu0
    %v709 = vadd.f32 %v552, %v708
    %v710 = vpop.f32.mrf.mxu0
    %v711 = vpop.f32.mrf.mxu0
    %v712 = vadd.f32 %v552, %v711
    %v713 = vpop.f32.mrf.mxu0
    %714 = vmatprep.mubr.bf16.mxu0 %v508
    %715 = vmatmul.mubr.bf16.gmra.mxu0 %v507
    %v716 = vpop.f32.mrf.mxu0
    %v717 = vadd.f32 %v552, %v716
    %v718 = vpop.f32.mrf.mxu0
    %v719 = vpop.f32.mrf.mxu0
    %v720 = vadd.f32 %v552, %v719
    %v721 = vpop.f32.mrf.mxu0
    %722 = vmatprep.mubr.bf16.mxu0 %v510
    %723 = vmatmul.mubr.bf16.gmra.mxu0 %v509
    %v724 = vpop.f32.mrf.mxu0
    %v725 = vadd.f32 %v552, %v724
    %v726 = vpop.f32.mrf.mxu0
    %v727 = vpop.f32.mrf.mxu0
    %v728 = vadd.f32 %v552, %v727
    %v729 = vpop.f32.mrf.mxu0
    %730 = vmatprep.mubr.bf16.mxu0 %v512
    %731 = vmatmul.mubr.bf16.gmra.mxu0 %v511
    %v732 = vpop.f32.mrf.mxu0
    %v733 = vadd.f32 %v552, %v732
    %v734 = vpop.f32.mrf.mxu0
    %v735 = vpop.f32.mrf.mxu0
    %v736 = vadd.f32 %v552, %v735
    %v737 = vpop.f32.mrf.mxu0
    %738 = vmatprep.mubr.bf16.mxu0 %v514
    %739 = vmatmul.mubr.bf16.gmra.mxu0 %v513
    %v740 = vpop.f32.mrf.mxu0
    %v741 = vadd.f32 %v552, %v740
    %v742 = vpop.f32.mrf.mxu0
    %v743 = vpop.f32.mrf.mxu0
    %v744 = vadd.f32 %v552, %v743
    %v745 = vpop.f32.mrf.mxu0
    %746 = vdwg.mxu0
    %v747 = vmax.f32 %v685, 0.0
    %v748 = vmax.f32 %v688, 0.0
    %v749 = vmax.f32 %v693, 0.0
    %v750 = vmax.f32 %v696, 0.0
    %v751 = vmax.f32 %v701, 0.0
    %v752 = vmax.f32 %v704, 0.0
    %v753 = vmax.f32 %v709, 0.0
    %v754 = vmax.f32 %v712, 0.0
    %v755 = vmax.f32 %v717, 0.0
    %v756 = vmax.f32 %v720, 0.0
    %v757 = vmax.f32 %v725, 0.0
    %v758 = vmax.f32 %v728, 0.0
    %v759 = vmax.f32 %v733, 0.0
    %v760 = vmax.f32 %v736, 0.0
    %v761 = vmax.f32 %v741, 0.0
    %v762 = vmax.f32 %v744, 0.0
    %v763 = vpack.c.bf16 %v748, %v747
    %v764 = vpack.c.bf16 %v750, %v749
    %v765 = vpack.c.bf16 %v752, %v751
    %v766 = vpack.c.bf16 %v754, %v753
    %v767 = vpack.c.bf16 %v756, %v755
    %v768 = vpack.c.bf16 %v758, %v757
    %v769 = vpack.c.bf16 %v760, %v759
    %v770 = vpack.c.bf16 %v762, %v761
    %v779 = vunpack.c.l.b16 %v763
    %v780 = vunpack.c.h.b16 %v763
    %v781 = vunpack.c.l.b16 %v764
    %v782 = vunpack.c.h.b16 %v764
    %v783 = vunpack.c.l.b16 %v765
    %v784 = vunpack.c.h.b16 %v765
    %v785 = vunpack.c.l.b16 %v766
    %v786 = vunpack.c.h.b16 %v766
    %v787 = vunpack.c.l.b16 %v767
    %v788 = vunpack.c.h.b16 %v767
    %v789 = vunpack.c.l.b16 %v768
    %v790 = vunpack.c.h.b16 %v768
    %v791 = vunpack.c.l.b16 %v769
    %v792 = vunpack.c.h.b16 %v769
    %v793 = vunpack.c.l.b16 %v770
    %v794 = vunpack.c.h.b16 %v770
    %v795 = vpack.c.b16 %v779, %v779
    %v796 = vpack.c.b16 %v780, %v780
    %v797 = vpack.c.b16 %v781, %v781
    %v798 = vpack.c.b16 %v782, %v782
    %v799 = vpack.c.b16 %v783, %v783
    %v800 = vpack.c.b16 %v784, %v784
    %v801 = vpack.c.b16 %v785, %v785
    %v802 = vpack.c.b16 %v786, %v786
    %v803 = vpack.c.b16 %v787, %v787
    %v804 = vpack.c.b16 %v788, %v788
    %v805 = vpack.c.b16 %v789, %v789
    %v806 = vpack.c.b16 %v790, %v790
    %v807 = vpack.c.b16 %v791, %v791
    %v808 = vpack.c.b16 %v792, %v792
    %v809 = vpack.c.b16 %v793, %v793
    %v810 = vpack.c.b16 %v794, %v794
    %827 = vst [vmem:[%s5] sm:$0xf] %v795
    %828 = vst [vmem:[%s5 + $0x4] sm:$0xf] %v796
    %829 = vst [vmem:[%s5 + $0x8] sm:$0xf] %v797
    %830 = vst [vmem:[%s5 + $0xc] sm:$0xf] %v798
    %831 = vst [vmem:[%s5 + $0x10] sm:$0xf] %v799
    %832 = vst [vmem:[%s5 + $0x14] sm:$0xf] %v800
    %833 = vst [vmem:[%s5 + $0x18] sm:$0xf] %v801
    %834 = vst [vmem:[%s5 + $0x1c] sm:$0xf] %v802
    %835 = vst [vmem:[%s5 + $0x20] sm:$0xf] %v803
    %836 = vst [vmem:[%s5 + $0x24] sm:$0xf] %v804
    %837 = vst [vmem:[%s5 + $0x28] sm:$0xf] %v805
    %838 = vst [vmem:[%s5 + $0x2c] sm:$0xf] %v806
    %839 = vst [vmem:[%s5 + $0x30] sm:$0xf] %v807
    %840 = vst [vmem:[%s5 + $0x34] sm:$0xf] %v808
    %841 = vst [vmem:[%s5 + $0x38] sm:$0xf] %v809
    %842 = vst [vmem:[%s5 + $0x3c] sm:$0xf] %v810
  $region29: #{graphsage_forward.2} parent=0 // pred_fallthru
    _
  // Predicated region
  $region30: #{graphsage_forward.2} parent=0 // pred_check
    _
  $region31: #{graphsage_forward.2} parent=0 // pred_check_branch
    %844 = sbr.rel (0) target = $region33
  $region32: #{graphsage_forward.2} parent=0 // pred_region
    _
  $region33: #{graphsage_forward.2} parent=0 // pred_fallthru
    _
  // Predicated region
  $region34: #{graphsage_forward.2} parent=0 // pred_check
    _
  $region35: #{graphsage_forward.2} parent=0 // pred_check_branch
    %846 = sbr.rel (0) target = $region37
  $region36: #{graphsage_forward.2} parent=0 // pred_region
    _
  $region37: #{graphsage_forward.2} parent=0 // pred_fallthru
    _

</llo_original>
